<compile_context>
chip_gen: v7x
topology: tpu7x:2x2x1
jax: 0.10.0
libtpu: 0.0.40
codegen_flags: <defaults>
</compile_context>

<pallas_src>
import functools

import jax
import jax.numpy as jnp
from jax import lax
from jax.experimental import pallas as pl
from jax.experimental.pallas import tpu as pltpu


def _bhp_kernel(fk_ref, trow_ref, tcol_ref, invc_ref, delta_ref, out_ref, *,
                n_real, inv_t, block_rows):
    """One query-row strip of the BHP loss.

    fk_ref:    [N_pad, D_pad] bf16  all feature rows (resident, single-buffered)
    trow_ref:  [TM, 1]        i32   targets of this strip's query rows
    tcol_ref:  [1, N_pad]     i32   targets of all columns (padded cols = -1)
    invc_ref:  [1, N_pad]     f32   1 / class_count(target_j)        (pad -> 1)
    delta_ref: [1, N_pad]     f32   1/(count-1) - 1/count            (pad -> 0)
    out_ref:   [TM, 1]        f32   per-row mean_log_prob_pos (0 for pad rows)
    """
    i = pl.program_id(0)
    tm = block_rows
    n_pad = fk_ref.shape[0]
    row_start = pl.multiple_of(i * tm, tm)

    # Query strip sliced from the resident keys; 1/T folded in on [TM, D]
    # (instead of scaling the [TM, N] logits strip).
    q = fk_ref[pl.ds(row_start, tm), :] * inv_t                   # bf16 [TM, D]

    # Logits strip: contract over D on the MXU, bf16 in / f32 accumulate.
    logits = lax.dot_general(
        q, fk_ref[...],
        dimension_numbers=(((1,), (1,)), ((), ())),
        preferred_element_type=jnp.float32,
    )                                                              # [TM, N_pad]

    # Masks synthesized in-kernel from iota + targets (never shipped as [N,N]).
    row_ids = row_start + lax.broadcasted_iota(jnp.int32, (tm, n_pad), 0)
    col_ids = lax.broadcasted_iota(jnp.int32, (tm, n_pad), 1)
    col_valid = col_ids < n_real
    lmask = jnp.logical_and(row_ids != col_ids, col_valid)         # logits_mask
    posf = jnp.where(
        jnp.logical_and(trow_ref[...] == tcol_ref[...], lmask), 1.0, 0.0)

    # Row-max over valid columns (stability only; cancels exactly in log_prob).
    m = jnp.max(jnp.where(col_valid, logits, jnp.float32(-1e30)),
                axis=1, keepdims=True)
    logits = logits - m

    # exp_logits / per_ins_weight without materializing per_ins_weight:
    #   1/(count - mask) = 1/count + posf * (1/(count-1) - 1/count)
    exp_l = jnp.where(lmask, jnp.exp(logits), 0.0)
    exp_sum = jnp.sum(exp_l * (invc_ref[...] + posf * delta_ref[...]),
                      axis=1, keepdims=True)                       # [TM, 1]
    log_denom = jnp.log(exp_sum)                                   # [TM, 1]

    # Fused log_prob: (mask*log_prob).sum = sum(posf*logits) - log_denom*sum(posf)
    num = jnp.sum(posf * logits, axis=1, keepdims=True)            # [TM, 1]
    den = jnp.sum(posf, axis=1, keepdims=True)                     # [TM, 1]
    # TODO(synk): a valid row with zero positives yields 0 here, whereas the
    # torch reference produces NaN (0/0); identical whenever every class has
    # >= 2 members (guaranteed with >= 1 proxy per class plus two views).
    mlpp = (num - log_denom * den) / jnp.maximum(den, 1.0)

    row_valid = (row_start
                 + lax.broadcasted_iota(jnp.int32, (tm, 1), 0)) < n_real
    out_ref[...] = jnp.where(row_valid, mlpp, 0.0)


def bhp_loss(proxy, features, targets, cls_num_list, proxy_num_list,
             temperature=0.1, block_rows=None):
    """proxy: [P, D], features: [B, 2, D], targets: [B] int.  Returns scalar."""
    B, V, D = features.shape
    assert V == 2, "BHP expects two views per sample (features.shape[1] == 2)"
    P = int(sum(int(n) for n in proxy_num_list))
    C = len(cls_num_list)
    N = 2 * B + P

    # Per-generation VMEM capacity (v5e/v6e: 128 MiB, v7x: 64 MiB per core).
    try:
        vmem_cap = int(pltpu.get_tpu_info().vmem_capacity_bytes)
    except Exception:
        vmem_cap = 64 * 1024 * 1024      # conservative (v7x-sized) fallback

    if block_rows is None:
        # Bigger strips on 128-MiB-VMEM parts (v5e/v6e); 128 on v7x / small N.
        block_rows = 256 if (vmem_cap >= 96 * 1024 * 1024 and N >= 256) else 128
    assert block_rows % 128 == 0

    # Lane-dense padding: columns to a multiple of block_rows, D to 128.
    n_pad = ((max(N, block_rows) + block_rows - 1) // block_rows) * block_rows
    d_pad = max(128, ((D + 127) // 128) * 128)

    targets = targets.reshape(-1).astype(jnp.int32)
    targets_proxy = jnp.concatenate(
        [jnp.full((int(n),), i, dtype=jnp.int32)
         for i, n in enumerate(proxy_num_list)])
    t_full = jnp.concatenate([targets, targets, targets_proxy])          # [N]

    # Class counts over extended targets -> per-column reciprocals.
    counts_per_class = jnp.sum(jax.nn.one_hot(t_full, C, dtype=jnp.float32),
                               axis=0)
    counts = counts_per_class[t_full]                                    # [N]
    inv_c = 1.0 / counts
    inv_cm1 = jnp.where(counts > 1.0, 1.0 / jnp.maximum(counts - 1.0, 1.0), 1.0)
    delta = inv_cm1 - inv_c          # only ever read where posf==1 (count >= 2)

    # cat(unbind(features, dim=1)) + proxy -> [N, D]; bf16 keys for the MXU.
    feats = jnp.concatenate(
        [features[:, 0, :], features[:, 1, :], proxy], axis=0).astype(jnp.float32)
    feats_p = jnp.zeros((n_pad, d_pad), jnp.bfloat16).at[:N, :D].set(
        feats.astype(jnp.bfloat16))
    t_col = jnp.full((1, n_pad), -1, jnp.int32).at[0, :N].set(t_full)
    t_row = t_col.reshape(n_pad, 1)
    inv_c_p = jnp.ones((1, n_pad), jnp.float32).at[0, :N].set(inv_c)
    delta_p = jnp.zeros((1, n_pad), jnp.float32).at[0, :N].set(delta)

    grid_n = n_pad // block_rows

    # VMEM budget: single-buffered bf16 keys + ~6 live [TM, N] f32 temps + misc.
    work_bytes = (n_pad * d_pad * 2
                  + 6 * block_rows * n_pad * 4
                  + 4 * 4 * n_pad
                  + 4 * 4 * block_rows)
    vmem_limit = int(min(max(int(1.5 * work_bytes), 16 << 20),
                         int(0.80 * vmem_cap)))

    kernel = functools.partial(_bhp_kernel, n_real=N,
                               inv_t=float(1.0 / temperature),
                               block_rows=block_rows)

    def build(single_buffer):
        kw = {"pipeline_mode": pl.Buffered(1)} if single_buffer else {}

        def resident(shape):
            return pl.BlockSpec(shape, lambda i: (0, 0), **kw)

        return pl.pallas_call(
            kernel,
            out_shape=jax.ShapeDtypeStruct((n_pad, 1), jnp.float32),
            grid_spec=pltpu.PrefetchScalarGridSpec(
                num_scalar_prefetch=0,
                grid=(grid_n,),
                in_specs=[
                    resident((n_pad, d_pad)),                         # keys
                    pl.BlockSpec((block_rows, 1), lambda i: (i, 0)),  # row tgts
                    resident((1, n_pad)),                             # col tgts
                    resident((1, n_pad)),                             # 1/count
                    resident((1, n_pad)),                             # delta
                ],
                out_specs=pl.BlockSpec((block_rows, 1), lambda i: (i, 0)),
            ),
            compiler_params=pltpu.CompilerParams(
                dimension_semantics=("parallel",),   # strips are independent
                vmem_limit_bytes=vmem_limit,
            ),
        )

    args = (feats_p, t_row, t_col, inv_c_p, delta_p)
    try:
        mlpp = build(True)(*args)
    except Exception:
        # Fallback if this JAX build rejects Buffered(1) on resident blocks.
        mlpp = build(False)(*args)

    return -jnp.sum(mlpp) / jnp.float32(N)


def _bhp_loss_ref(proxy, features, targets, cls_num_list, proxy_num_list,
                  temperature=0.1, matmul_dtype=jnp.float32):
    """Pure-JAX mirror of the PyTorch forward (optionally bf16 matmul inputs)."""
    C = len(cls_num_list)
    targets = targets.reshape(-1).astype(jnp.int32)
    targets_proxy = jnp.concatenate(
        [jnp.full((int(n),), i, dtype=jnp.int32)
         for i, n in enumerate(proxy_num_list)])
    t = jnp.concatenate([targets, targets, targets_proxy])
    N = t.shape[0]
    counts = jnp.sum(jax.nn.one_hot(t, C, dtype=jnp.float32), axis=0)
    mask = (t[:, None] == t[None, :]).astype(jnp.float32)
    lmask = 1.0 - jnp.eye(N, dtype=jnp.float32)
    mask = mask * lmask
    f = jnp.concatenate(
        [features[:, 0, :], features[:, 1, :], proxy], axis=0).astype(jnp.float32)
    fm = f.astype(matmul_dtype)
    logits = jnp.dot(fm, fm.T, preferred_element_type=jnp.float32) / temperature
    logits = logits - jnp.max(logits, axis=1, keepdims=True)
    exp_logits = jnp.exp(logits) * lmask
    piw = counts[t][None, :] - mask
    exp_sum = jnp.sum(exp_logits / piw, axis=1, keepdims=True)
    log_prob = logits - jnp.log(exp_sum)
    mlpp = jnp.sum(mask * log_prob, axis=1) / jnp.sum(mask, axis=1)
    return jnp.mean(-mlpp)


if __name__ == "__main__":
    key = jax.random.PRNGKey(0)
    B, D, C = 8, 32, 4
    cls_num_list = [10, 10, 10, 10]
    proxy_num_list = [2, 2, 2, 2]
    P = sum(proxy_num_list)

    k1, k2, k3 = jax.random.split(key, 3)
    features = jax.random.normal(k1, (B, 2, D), dtype=jnp.float32)
    features = features / jnp.linalg.norm(features, axis=-1, keepdims=True)
    proxy = jax.random.normal(k2, (P, D), dtype=jnp.float32)
    proxy = proxy / jnp.linalg.norm(proxy, axis=-1, keepdims=True)
    targets = jax.random.randint(k3, (B,), 0, C, dtype=jnp.int32)

    loss = bhp_loss(proxy, features, targets, cls_num_list, proxy_num_list,
                    temperature=0.1)
    loss = jax.block_until_ready(loss)

    # bf16-matmul-matched reference (tight) and the f32 reference (bf16-sized
    # tolerance: 1/T = 10 amplifies bf16 rounding on the logits).
    ref_bf16 = _bhp_loss_ref(proxy, features, targets, cls_num_list,
                             proxy_num_list, temperature=0.1,
                             matmul_dtype=jnp.bfloat16)
    ref_f32 = _bhp_loss_ref(proxy, features, targets, cls_num_list,
                            proxy_num_list, temperature=0.1,
                            matmul_dtype=jnp.float32)
    assert jnp.isfinite(loss), "loss is not finite"
    assert jnp.allclose(loss, ref_bf16, rtol=1e-2, atol=1e-2), (loss, ref_bf16)
    assert jnp.allclose(loss, ref_f32, rtol=5e-2, atol=5e-2), (loss, ref_f32)

    print("KERNEL_OK")
</pallas_src>

<mosaic_0001>
module attributes {stable_mosaic.version = 11 : i64} {
  func.func @_bhp_kernel(%arg0: i32, %arg1: memref<128x128xbf16, #tpu.memory_space<vmem>>, %arg2: memref<128x1xi32, #tpu.memory_space<vmem>>, %arg3: memref<1x128xi32, #tpu.memory_space<vmem>>, %arg4: memref<1x128xf32, #tpu.memory_space<vmem>>, %arg5: memref<1x128xf32, #tpu.memory_space<vmem>>, %arg6: memref<128x1xf32, #tpu.memory_space<vmem>>) attributes {dimension_semantics = [#tpu.dimension_semantics<parallel>], iteration_bounds = array<i64: 1>, scalar_prefetch = 0 : i64, scratch_operands = 0 : i64, tpu.core_type = #tpu.core_type<tc>, window_params = [{pipeline_mode = #tpu.pipeline_mode<synchronous>, transform_indices = @transform_0, window_bounds = array<i64: 128, 128>}, {transform_indices = @transform_1, window_bounds = array<i64: 128, 1>}, {pipeline_mode = #tpu.pipeline_mode<synchronous>, transform_indices = @transform_2, window_bounds = array<i64: 1, 128>}, {pipeline_mode = #tpu.pipeline_mode<synchronous>, transform_indices = @transform_3, window_bounds = array<i64: 1, 128>}, {pipeline_mode = #tpu.pipeline_mode<synchronous>, transform_indices = @transform_4, window_bounds = array<i64: 1, 128>}, {transform_indices = @transform_5, window_bounds = array<i64: 128, 1>}]} {
    %c128_i32 = arith.constant 128 : i32
    %0 = arith.muli %arg0, %c128_i32 : i32
    %1 = tpu.assume_multiple %0, 128 : i32
    %2 = arith.index_cast %1 : i32 to index
    %c0 = arith.constant 0 : index
    %3 = vector.load %arg1[%2, %c0] : memref<128x128xbf16, #tpu.memory_space<vmem>>, vector<128x128xbf16>
    %cst = arith.constant 1.000000e+01 : bf16
    %4 = vector.broadcast %cst : bf16 to vector<128x128xbf16>
    %5 = arith.mulf %3, %4 : vector<128x128xbf16>
    %c0_0 = arith.constant 0 : index
    %c0_1 = arith.constant 0 : index
    %6 = vector.load %arg1[%c0_0, %c0_1] : memref<128x128xbf16, #tpu.memory_space<vmem>>, vector<128x128xbf16>
    %cst_2 = arith.constant dense<0.000000e+00> : vector<128x128xf32>
    %7 = tpu.matmul %5, %6, %cst_2 {dimension_numbers = #tpu.dot_dimension_numbers<[1], [1], [0], [0], [0, 0, 1, 0], [], []>} : vector<128x128xbf16>, vector<128x128xbf16>, vector<128x128xf32> -> vector<128x128xf32>
    %8 = tpu.iota {dimensions = array<i32: 0>} : vector<128x128xi32>
    %9 = vector.broadcast %1 : i32 to vector<128x128xi32>
    %10 = arith.addi %9, %8 : vector<128x128xi32>
    %11 = tpu.iota {dimensions = array<i32: 1>} : vector<128x128xi32>
    %c24_i32 = arith.constant 24 : i32
    %12 = vector.broadcast %c24_i32 : i32 to vector<128x128xi32>
    %13 = arith.cmpi slt, %11, %12 : vector<128x128xi32>
    %14 = arith.cmpi ne, %10, %11 : vector<128x128xi32>
    %15 = arith.andi %14, %13 : vector<128x128xi1>
    %c0_3 = arith.constant 0 : index
    %c0_4 = arith.constant 0 : index
    %16 = vector.load %arg2[%c0_3, %c0_4] : memref<128x1xi32, #tpu.memory_space<vmem>>, vector<128x1xi32>
    %c0_5 = arith.constant 0 : index
    %c0_6 = arith.constant 0 : index
    %17 = vector.load %arg3[%c0_5, %c0_6] : memref<1x128xi32, #tpu.memory_space<vmem>>, vector<1x128xi32>
    %18 = vector.broadcast %16 : vector<128x1xi32> to vector<128x128xi32>
    %19 = vector.broadcast %17 : vector<1x128xi32> to vector<128x128xi32>
    %20 = arith.cmpi eq, %18, %19 : vector<128x128xi32>
    %21 = arith.andi %20, %15 : vector<128x128xi1>
    %cst_7 = arith.constant 1.000000e+00 : f32
    %cst_8 = arith.constant 0.000000e+00 : f32
    %22 = vector.broadcast %cst_7 : f32 to vector<128x128xf32>
    %23 = vector.broadcast %cst_8 : f32 to vector<128x128xf32>
    %24 = arith.select %21, %22, %23 : vector<128x128xi1>, vector<128x128xf32>
    %cst_9 = arith.constant -1.000000e+30 : f32
    %25 = vector.broadcast %cst_9 : f32 to vector<128x128xf32>
    %26 = arith.select %13, %7, %25 : vector<128x128xi1>, vector<128x128xf32>
    %cst_10 = arith.constant dense<0xFF800000> : vector<128xf32>
    %27 = vector.multi_reduction <maximumf>, %26, %cst_10 [1] : vector<128x128xf32> to vector<128xf32>
    %28 = vector.shape_cast %27 : vector<128xf32> to vector<128x1xf32>
    %29 = vector.broadcast %28 : vector<128x1xf32> to vector<128x128xf32>
    %30 = arith.subf %7, %29 : vector<128x128xf32>
    %31 = math.exp %30 : vector<128x128xf32>
    %cst_11 = arith.constant 0.000000e+00 : f32
    %32 = vector.broadcast %cst_11 : f32 to vector<128x128xf32>
    %33 = arith.select %15, %31, %32 : vector<128x128xi1>, vector<128x128xf32>
    %c0_12 = arith.constant 0 : index
    %c0_13 = arith.constant 0 : index
    %34 = vector.load %arg4[%c0_12, %c0_13] : memref<1x128xf32, #tpu.memory_space<vmem>>, vector<1x128xf32>
    %c0_14 = arith.constant 0 : index
    %c0_15 = arith.constant 0 : index
    %35 = vector.load %arg5[%c0_14, %c0_15] : memref<1x128xf32, #tpu.memory_space<vmem>>, vector<1x128xf32>
    %36 = vector.broadcast %35 : vector<1x128xf32> to vector<128x128xf32>
    %37 = arith.mulf %24, %36 : vector<128x128xf32>
    %38 = vector.broadcast %34 : vector<1x128xf32> to vector<128x128xf32>
    %39 = arith.addf %38, %37 : vector<128x128xf32>
    %40 = arith.mulf %33, %39 : vector<128x128xf32>
    %cst_16 = arith.constant dense<0.000000e+00> : vector<128xf32>
    %41 = vector.multi_reduction <add>, %40, %cst_16 [1] : vector<128x128xf32> to vector<128xf32>
    %42 = vector.shape_cast %41 : vector<128xf32> to vector<128x1xf32>
    %43 = math.log %42 : vector<128x1xf32>
    %44 = arith.mulf %24, %30 : vector<128x128xf32>
    %cst_17 = arith.constant dense<0.000000e+00> : vector<128xf32>
    %45 = vector.multi_reduction <add>, %44, %cst_17 [1] : vector<128x128xf32> to vector<128xf32>
    %46 = vector.shape_cast %45 : vector<128xf32> to vector<128x1xf32>
    %cst_18 = arith.constant dense<0.000000e+00> : vector<128xf32>
    %47 = vector.multi_reduction <add>, %24, %cst_18 [1] : vector<128x128xf32> to vector<128xf32>
    %48 = vector.shape_cast %47 : vector<128xf32> to vector<128x1xf32>
    %49 = arith.mulf %43, %48 : vector<128x1xf32>
    %50 = arith.subf %46, %49 : vector<128x1xf32>
    %cst_19 = arith.constant 1.000000e+00 : f32
    %51 = vector.broadcast %cst_19 : f32 to vector<128x1xf32>
    %52 = arith.maximumf %48, %51 : vector<128x1xf32>
    %53 = arith.divf %50, %52 : vector<128x1xf32>
    %54 = tpu.iota {dimensions = array<i32: 0>} : vector<128x1xi32>
    %55 = vector.broadcast %1 : i32 to vector<128x1xi32>
    %56 = arith.addi %55, %54 : vector<128x1xi32>
    %c24_i32_20 = arith.constant 24 : i32
    %57 = vector.broadcast %c24_i32_20 : i32 to vector<128x1xi32>
    %58 = arith.cmpi slt, %56, %57 : vector<128x1xi32>
    %cst_21 = arith.constant 0.000000e+00 : f32
    %59 = vector.broadcast %cst_21 : f32 to vector<128x1xf32>
    %60 = arith.select %58, %53, %59 : vector<128x1xi1>, vector<128x1xf32>
    %c0_22 = arith.constant 0 : index
    %c0_23 = arith.constant 0 : index
    %61 = vector.load %arg6[%c0_22, %c0_23] : memref<128x1xf32, #tpu.memory_space<vmem>>, vector<128x1xf32>
    tpu.vector_store %arg6[%c0_22, %c0_23], %60 {strides = array<i32>} : memref<128x1xf32, #tpu.memory_space<vmem>>, vector<128x1xf32>,
    return
  }
  func.func @transform_0(%arg0: i32) -> (i32, i32) {
    %c0_i32 = arith.constant 0 : i32
    %c0_i32_0 = arith.constant 0 : i32
    %c0_i32_1 = arith.constant 0 : i32
    return %c0_i32, %c0_i32_0 : i32, i32
  }
  func.func @transform_1(%arg0: i32) -> (i32, i32) {
    %c0_i32 = arith.constant 0 : i32
    %c0_i32_0 = arith.constant 0 : i32
    return %arg0, %c0_i32 : i32, i32
  }
  func.func @transform_2(%arg0: i32) -> (i32, i32) {
    %c0_i32 = arith.constant 0 : i32
    %c0_i32_0 = arith.constant 0 : i32
    %c0_i32_1 = arith.constant 0 : i32
    return %c0_i32, %c0_i32_0 : i32, i32
  }
  func.func @transform_3(%arg0: i32) -> (i32, i32) {
    %c0_i32 = arith.constant 0 : i32
    %c0_i32_0 = arith.constant 0 : i32
    %c0_i32_1 = arith.constant 0 : i32
    return %c0_i32, %c0_i32_0 : i32, i32
  }
  func.func @transform_4(%arg0: i32) -> (i32, i32) {
    %c0_i32 = arith.constant 0 : i32
    %c0_i32_0 = arith.constant 0 : i32
    %c0_i32_1 = arith.constant 0 : i32
    return %c0_i32, %c0_i32_0 : i32, i32
  }
  func.func @transform_5(%arg0: i32) -> (i32, i32) {
    %c0_i32 = arith.constant 0 : i32
    %c0_i32_0 = arith.constant 0 : i32
    return %arg0, %c0_i32 : i32, i32
  }
}

module attributes {stable_mosaic.version = 11 : i64} {
  func.func @_bhp_kernel(%arg0: i32, %arg1: memref<128x128xbf16, #tpu.memory_space<vmem>>, %arg2: memref<128x1xi32, #tpu.memory_space<vmem>>, %arg3: memref<1x128xi32, #tpu.memory_space<vmem>>, %arg4: memref<1x128xf32, #tpu.memory_space<vmem>>, %arg5: memref<1x128xf32, #tpu.memory_space<vmem>>, %arg6: memref<128x1xf32, #tpu.memory_space<vmem>>) attributes {dimension_semantics = [#tpu.dimension_semantics<parallel>], iteration_bounds = array<i64: 1>, scalar_prefetch = 0 : i64, scratch_operands = 0 : i64, tpu.core_type = #tpu.core_type<tc>, window_params = [{pipeline_mode = #tpu.pipeline_mode<synchronous>, transform_indices = @transform_0, window_bounds = array<i64: 128, 128>}, {transform_indices = @transform_1, window_bounds = array<i64: 128, 1>}, {pipeline_mode = #tpu.pipeline_mode<synchronous>, transform_indices = @transform_2, window_bounds = array<i64: 1, 128>}, {pipeline_mode = #tpu.pipeline_mode<synchronous>, transform_indices = @transform_3, window_bounds = array<i64: 1, 128>}, {pipeline_mode = #tpu.pipeline_mode<synchronous>, transform_indices = @transform_4, window_bounds = array<i64: 1, 128>}, {transform_indices = @transform_5, window_bounds = array<i64: 128, 1>}]} {
    %c128_i32 = arith.constant 128 : i32
    %0 = arith.muli %arg0, %c128_i32 : i32
    %1 = tpu.assume_multiple %0, 128 : i32
    %2 = arith.index_cast %1 : i32 to index
    %c0 = arith.constant 0 : index
    %3 = vector.load %arg1[%2, %c0] : memref<128x128xbf16, #tpu.memory_space<vmem>>, vector<128x128xbf16>
    %cst = arith.constant 1.000000e+01 : bf16
    %4 = vector.broadcast %cst : bf16 to vector<128x128xbf16>
    %5 = arith.mulf %3, %4 : vector<128x128xbf16>
    %c0_0 = arith.constant 0 : index
    %c0_1 = arith.constant 0 : index
    %6 = vector.load %arg1[%c0_0, %c0_1] : memref<128x128xbf16, #tpu.memory_space<vmem>>, vector<128x128xbf16>
    %cst_2 = arith.constant dense<0.000000e+00> : vector<128x128xf32>
    %7 = tpu.matmul %5, %6, %cst_2 {dimension_numbers = #tpu.dot_dimension_numbers<[1], [1], [0], [0], [0, 0, 1, 0], [], []>} : vector<128x128xbf16>, vector<128x128xbf16>, vector<128x128xf32> -> vector<128x128xf32>
    %8 = tpu.iota {dimensions = array<i32: 0>} : vector<128x128xi32>
    %9 = vector.broadcast %1 : i32 to vector<128x128xi32>
    %10 = arith.addi %9, %8 : vector<128x128xi32>
    %11 = tpu.iota {dimensions = array<i32: 1>} : vector<128x128xi32>
    %c24_i32 = arith.constant 24 : i32
    %12 = vector.broadcast %c24_i32 : i32 to vector<128x128xi32>
    %13 = arith.cmpi slt, %11, %12 : vector<128x128xi32>
    %14 = arith.cmpi ne, %10, %11 : vector<128x128xi32>
    %15 = arith.andi %14, %13 : vector<128x128xi1>
    %c0_3 = arith.constant 0 : index
    %c0_4 = arith.constant 0 : index
    %16 = vector.load %arg2[%c0_3, %c0_4] : memref<128x1xi32, #tpu.memory_space<vmem>>, vector<128x1xi32>
    %c0_5 = arith.constant 0 : index
    %c0_6 = arith.constant 0 : index
    %17 = vector.load %arg3[%c0_5, %c0_6] : memref<1x128xi32, #tpu.memory_space<vmem>>, vector<1x128xi32>
    %18 = vector.broadcast %16 : vector<128x1xi32> to vector<128x128xi32>
    %19 = vector.broadcast %17 : vector<1x128xi32> to vector<128x128xi32>
    %20 = arith.cmpi eq, %18, %19 : vector<128x128xi32>
    %21 = arith.andi %20, %15 : vector<128x128xi1>
    %cst_7 = arith.constant 1.000000e+00 : f32
    %cst_8 = arith.constant 0.000000e+00 : f32
    %22 = vector.broadcast %cst_7 : f32 to vector<128x128xf32>
    %23 = vector.broadcast %cst_8 : f32 to vector<128x128xf32>
    %24 = arith.select %21, %22, %23 : vector<128x128xi1>, vector<128x128xf32>
    %cst_9 = arith.constant -1.000000e+30 : f32
    %25 = vector.broadcast %cst_9 : f32 to vector<128x128xf32>
    %26 = arith.select %13, %7, %25 : vector<128x128xi1>, vector<128x128xf32>
    %cst_10 = arith.constant dense<0xFF800000> : vector<128xf32>
    %27 = vector.multi_reduction <maximumf>, %26, %cst_10 [1] : vector<128x128xf32> to vector<128xf32>
    %28 = vector.shape_cast %27 : vector<128xf32> to vector<128x1xf32>
    %29 = vector.broadcast %28 : vector<128x1xf32> to vector<128x128xf32>
    %30 = arith.subf %7, %29 : vector<128x128xf32>
    %31 = math.exp %30 : vector<128x128xf32>
    %cst_11 = arith.constant 0.000000e+00 : f32
    %32 = vector.broadcast %cst_11 : f32 to vector<128x128xf32>
    %33 = arith.select %15, %31, %32 : vector<128x128xi1>, vector<128x128xf32>
    %c0_12 = arith.constant 0 : index
    %c0_13 = arith.constant 0 : index
    %34 = vector.load %arg4[%c0_12, %c0_13] : memref<1x128xf32, #tpu.memory_space<vmem>>, vector<1x128xf32>
    %c0_14 = arith.constant 0 : index
    %c0_15 = arith.constant 0 : index
    %35 = vector.load %arg5[%c0_14, %c0_15] : memref<1x128xf32, #tpu.memory_space<vmem>>, vector<1x128xf32>
    %36 = vector.broadcast %35 : vector<1x128xf32> to vector<128x128xf32>
    %37 = arith.mulf %24, %36 : vector<128x128xf32>
    %38 = vector.broadcast %34 : vector<1x128xf32> to vector<128x128xf32>
    %39 = arith.addf %38, %37 : vector<128x128xf32>
    %40 = arith.mulf %33, %39 : vector<128x128xf32>
    %cst_16 = arith.constant dense<0.000000e+00> : vector<128xf32>
    %41 = vector.multi_reduction <add>, %40, %cst_16 [1] : vector<128x128xf32> to vector<128xf32>
    %42 = vector.shape_cast %41 : vector<128xf32> to vector<128x1xf32>
    %43 = math.log %42 : vector<128x1xf32>
    %44 = arith.mulf %24, %30 : vector<128x128xf32>
    %cst_17 = arith.constant dense<0.000000e+00> : vector<128xf32>
    %45 = vector.multi_reduction <add>, %44, %cst_17 [1] : vector<128x128xf32> to vector<128xf32>
    %46 = vector.shape_cast %45 : vector<128xf32> to vector<128x1xf32>
    %cst_18 = arith.constant dense<0.000000e+00> : vector<128xf32>
    %47 = vector.multi_reduction <add>, %24, %cst_18 [1] : vector<128x128xf32> to vector<128xf32>
    %48 = vector.shape_cast %47 : vector<128xf32> to vector<128x1xf32>
    %49 = arith.mulf %43, %48 : vector<128x1xf32>
    %50 = arith.subf %46, %49 : vector<128x1xf32>
    %cst_19 = arith.constant 1.000000e+00 : f32
    %51 = vector.broadcast %cst_19 : f32 to vector<128x1xf32>
    %52 = arith.maximumf %48, %51 : vector<128x1xf32>
    %53 = arith.divf %50, %52 : vector<128x1xf32>
    %54 = tpu.iota {dimensions = array<i32: 0>} : vector<128x1xi32>
    %55 = vector.broadcast %1 : i32 to vector<128x1xi32>
    %56 = arith.addi %55, %54 : vector<128x1xi32>
    %c24_i32_20 = arith.constant 24 : i32
    %57 = vector.broadcast %c24_i32_20 : i32 to vector<128x1xi32>
    %58 = arith.cmpi slt, %56, %57 : vector<128x1xi32>
    %cst_21 = arith.constant 0.000000e+00 : f32
    %59 = vector.broadcast %cst_21 : f32 to vector<128x1xf32>
    %60 = arith.select %58, %53, %59 : vector<128x1xi1>, vector<128x1xf32>
    %c0_22 = arith.constant 0 : index
    %c0_23 = arith.constant 0 : index
    %61 = vector.load %arg6[%c0_22, %c0_23] : memref<128x1xf32, #tpu.memory_space<vmem>>, vector<128x1xf32>
    tpu.vector_store %arg6[%c0_22, %c0_23], %60 {strides = array<i32>} : memref<128x1xf32, #tpu.memory_space<vmem>>, vector<128x1xf32>,
    return
  }
  func.func @transform_0(%arg0: i32) -> (i32, i32) {
    %c0_i32 = arith.constant 0 : i32
    %c0_i32_0 = arith.constant 0 : i32
    %c0_i32_1 = arith.constant 0 : i32
    return %c0_i32, %c0_i32_0 : i32, i32
  }
  func.func @transform_1(%arg0: i32) -> (i32, i32) {
    %c0_i32 = arith.constant 0 : i32
    %c0_i32_0 = arith.constant 0 : i32
    return %arg0, %c0_i32 : i32, i32
  }
  func.func @transform_2(%arg0: i32) -> (i32, i32) {
    %c0_i32 = arith.constant 0 : i32
    %c0_i32_0 = arith.constant 0 : i32
    %c0_i32_1 = arith.constant 0 : i32
    return %c0_i32, %c0_i32_0 : i32, i32
  }
  func.func @transform_3(%arg0: i32) -> (i32, i32) {
    %c0_i32 = arith.constant 0 : i32
    %c0_i32_0 = arith.constant 0 : i32
    %c0_i32_1 = arith.constant 0 : i32
    return %c0_i32, %c0_i32_0 : i32, i32
  }
  func.func @transform_4(%arg0: i32) -> (i32, i32) {
    %c0_i32 = arith.constant 0 : i32
    %c0_i32_0 = arith.constant 0 : i32
    %c0_i32_1 = arith.constant 0 : i32
    return %c0_i32, %c0_i32_0 : i32, i32
  }
  func.func @transform_5(%arg0: i32) -> (i32, i32) {
    %c0_i32 = arith.constant 0 : i32
    %c0_i32_0 = arith.constant 0 : i32
    return %arg0, %c0_i32 : i32, i32
  }
}

</mosaic_0001>

<llo_original>
// kernel: tpu_custom_call.1
$region0: #{tpu_custom_call.1}
  #allocation0 [shape = 'u32[]', space=smem, size = 0x4, offset = 0x4, fixed_abs, tag = 'smem constant byte address 0x4 - core index']
  #allocation1 [shape = 'u32[144,128]{1,0:T(1,128)}', space=vmem, size = 0x12000, scoped, tag = 'internal scratch']
  %s0 = inlined_call_operand.vmem [shape: bf16[128,128], index: 0, kind: input, shape index: {}]
  %s1 = inlined_call_operand.vmem [shape: s32[128,1], index: 1, kind: input, shape index: {}]
  %s2 = inlined_call_operand.vmem [shape: s32[1,128], index: 2, kind: input, shape index: {}]
  %s3 = inlined_call_operand.vmem [shape: f32[1,128], index: 3, kind: input, shape index: {}]
  %s4 = inlined_call_operand.vmem [shape: f32[1,128], index: 4, kind: input, shape index: {}]
  %s5 = inlined_call_operand.vmem [shape: f32[128,1], index: 5, kind: output, shape index: {}]
  %s6 = sld [smem:[#allocation0]]
  $region30: #{tpu_custom_call.1} parent=0
    _
  %s8 = ssub.s32 1, %s6
  %s9 = scalar_select 0, %s8, %s6
  // Predicated region
  $region2: #{tpu_custom_call.1} parent=0 // pred_check
    _
  $region3: #{tpu_custom_call.1} parent=0 // pred_check_branch
    %11 = sbr.rel (0) target = $region5
  $region4: #{tpu_custom_call.1} parent=0 // pred_region
    _
  $region5: #{tpu_custom_call.1} parent=0 // pred_fallthru
    _
  // Predicated region
  $region6: #{tpu_custom_call.1} parent=0 // pred_check
    _
  $region7: #{tpu_custom_call.1} parent=0 // pred_check_branch
    %13 = sbr.rel (0) target = $region9
  $region8: #{tpu_custom_call.1} parent=0 // pred_region
    _
  $region9: #{tpu_custom_call.1} parent=0 // pred_fallthru
    _
  // Predicated region
  $region10: #{tpu_custom_call.1} parent=0 // pred_check
    _
  $region11: #{tpu_custom_call.1} parent=0 // pred_check_branch
    %15 = sbr.rel (0) target = $region13
  $region12: #{tpu_custom_call.1} parent=0 // pred_region
    _
  $region13: #{tpu_custom_call.1} parent=0 // pred_fallthru
    _
  // Predicated region
  $region14: #{tpu_custom_call.1} parent=0 // pred_check
    _
  $region15: #{tpu_custom_call.1} parent=0 // pred_check_branch
    %17 = sbr.rel (0) target = $region17
  $region16: #{tpu_custom_call.1} parent=0 // pred_region
    _
  $region17: #{tpu_custom_call.1} parent=0 // pred_fallthru
    _
  // Predicated region
  $region18: #{tpu_custom_call.1} parent=0 // pred_check
    _
  $region19: #{tpu_custom_call.1} parent=0 // pred_check_branch
    %19 = sbr.rel (0) target = $region21
  $region20: #{tpu_custom_call.1} parent=0 // pred_region
    _
  $region21: #{tpu_custom_call.1} parent=0 // pred_fallthru
    _
  %s22 = smul.u32 0, 128
  %s23 = sshra.s32 %s22, 3
  %s24 = sand.u32 %s22, 7
  %s25 = smul.addr %s23, 4
  %s26 = scalar_lea.vmem %s0, %s25
  %v27 = vld [vmem:[%s26] sm:$0xf]
  %v28 = vld [vmem:[%s26 + $0x4] sm:$0xf]
  %v29 = vld [vmem:[%s26 + $0x8] sm:$0xf]
  %v30 = vld [vmem:[%s26 + $0xc] sm:$0xf]
  %v31 = vld [vmem:[%s26 + $0x10] sm:$0xf]
  %v32 = vld [vmem:[%s26 + $0x14] sm:$0xf]
  %v33 = vld [vmem:[%s26 + $0x18] sm:$0xf]
  %v34 = vld [vmem:[%s26 + $0x1c] sm:$0xf]
  %v35 = vld [vmem:[%s26 + $0x20] sm:$0xf]
  %v36 = vld [vmem:[%s26 + $0x24] sm:$0xf]
  %v37 = vld [vmem:[%s26 + $0x28] sm:$0xf]
  %v38 = vld [vmem:[%s26 + $0x2c] sm:$0xf]
  %v39 = vld [vmem:[%s26 + $0x30] sm:$0xf]
  %v40 = vld [vmem:[%s26 + $0x34] sm:$0xf]
  %v41 = vld [vmem:[%s26 + $0x38] sm:$0xf]
  %v42 = vld [vmem:[%s26 + $0x3c] sm:$0xf]
  %v43 = vmul.bf16 %v27, 1092632864
  %v44 = vmul.bf16 %v28, 1092632864
  %v45 = vmul.bf16 %v29, 1092632864
  %v46 = vmul.bf16 %v30, 1092632864
  %v47 = vmul.bf16 %v31, 1092632864
  %v48 = vmul.bf16 %v32, 1092632864
  %v49 = vmul.bf16 %v33, 1092632864
  %v50 = vmul.bf16 %v34, 1092632864
  %v51 = vmul.bf16 %v35, 1092632864
  %v52 = vmul.bf16 %v36, 1092632864
  %v53 = vmul.bf16 %v37, 1092632864
  %v54 = vmul.bf16 %v38, 1092632864
  %v55 = vmul.bf16 %v39, 1092632864
  %v56 = vmul.bf16 %v40, 1092632864
  %v57 = vmul.bf16 %v41, 1092632864
  %v58 = vmul.bf16 %v42, 1092632864
  %v59 = vld [vmem:[%s0] sm:$0xf]
  %v60 = vld [vmem:[%s0 + $0x4] sm:$0xf]
  %v61 = vld [vmem:[%s0 + $0x8] sm:$0xf]
  %v62 = vld [vmem:[%s0 + $0xc] sm:$0xf]
  %v63 = vld [vmem:[%s0 + $0x10] sm:$0xf]
  %v64 = vld [vmem:[%s0 + $0x14] sm:$0xf]
  %v65 = vld [vmem:[%s0 + $0x18] sm:$0xf]
  %v66 = vld [vmem:[%s0 + $0x1c] sm:$0xf]
  %v67 = vld [vmem:[%s0 + $0x20] sm:$0xf]
  %v68 = vld [vmem:[%s0 + $0x24] sm:$0xf]
  %v69 = vld [vmem:[%s0 + $0x28] sm:$0xf]
  %v70 = vld [vmem:[%s0 + $0x2c] sm:$0xf]
  %v71 = vld [vmem:[%s0 + $0x30] sm:$0xf]
  %v72 = vld [vmem:[%s0 + $0x34] sm:$0xf]
  %v73 = vld [vmem:[%s0 + $0x38] sm:$0xf]
  %v74 = vld [vmem:[%s0 + $0x3c] sm:$0xf]
  %v91 = vunpack.c.l.b16 %v43
  %v92 = vunpack.c.l.b16 %v44
  %v93 = vunpack.c.l.b16 %v45
  %v94 = vunpack.c.l.b16 %v46
  %v95 = vunpack.c.l.b16 %v47
  %v96 = vunpack.c.l.b16 %v48
  %v97 = vunpack.c.l.b16 %v49
  %v98 = vunpack.c.l.b16 %v50
  %v99 = vunpack.c.l.b16 %v51
  %v100 = vunpack.c.l.b16 %v52
  %v101 = vunpack.c.l.b16 %v53
  %v102 = vunpack.c.l.b16 %v54
  %v103 = vunpack.c.l.b16 %v55
  %v104 = vunpack.c.l.b16 %v56
  %v105 = vunpack.c.l.b16 %v57
  %v106 = vunpack.c.l.b16 %v58
  %v107 = vpack.c.b16 %v92, %v91
  %v108 = vpack.c.b16 %v94, %v93
  %v109 = vpack.c.b16 %v96, %v95
  %v110 = vpack.c.b16 %v98, %v97
  %v111 = vpack.c.b16 %v100, %v99
  %v112 = vpack.c.b16 %v102, %v101
  %v113 = vpack.c.b16 %v104, %v103
  %v114 = vpack.c.b16 %v106, %v105
  %v139 = vunpack.c.l.b16 %v59
  %v140 = vunpack.c.l.b16 %v60
  %v141 = vunpack.c.l.b16 %v61
  %v142 = vunpack.c.l.b16 %v62
  %v143 = vunpack.c.l.b16 %v63
  %v144 = vunpack.c.l.b16 %v64
  %v145 = vunpack.c.l.b16 %v65
  %v146 = vunpack.c.l.b16 %v66
  %v147 = vunpack.c.l.b16 %v67
  %v148 = vunpack.c.l.b16 %v68
  %v149 = vunpack.c.l.b16 %v69
  %v150 = vunpack.c.l.b16 %v70
  %v151 = vunpack.c.l.b16 %v71
  %v152 = vunpack.c.l.b16 %v72
  %v153 = vunpack.c.l.b16 %v73
  %v154 = vunpack.c.l.b16 %v74
  %v155 = vpack.c.b16 %v140, %v139
  %v156 = vpack.c.b16 %v142, %v141
  %v157 = vpack.c.b16 %v144, %v143
  %v158 = vpack.c.b16 %v146, %v145
  %v159 = vpack.c.b16 %v148, %v147
  %v160 = vpack.c.b16 %v150, %v149
  %v161 = vpack.c.b16 %v152, %v151
  %v162 = vpack.c.b16 %v154, %v153
  %171 = vmatprep.subr.bf16.mxu0 0
  %172 = vmatpush1.bf16.xpose.msra.mxu0 %v155
  %173 = vmatprep.subr.bf16.mxu0 0
  %174 = vmatpush1.bf16.xpose.msra.mxu0 %v156
  %175 = vmatprep.subr.bf16.mxu0 0
  %176 = vmatpush1.bf16.xpose.msra.mxu0 %v157
  %177 = vmatprep.subr.bf16.mxu0 0
  %178 = vmatpush1.bf16.xpose.msra.mxu0 %v158
  %179 = vmatprep.subr.bf16.mxu0 0
  %180 = vmatpush1.bf16.xpose.msra.mxu0 %v159
  %181 = vmatprep.subr.bf16.mxu0 0
  %182 = vmatpush1.bf16.xpose.msra.mxu0 %v160
  %183 = vmatprep.subr.bf16.mxu0 0
  %184 = vmatpush1.bf16.xpose.msra.mxu0 %v161
  %185 = vmatprep.subr.bf16.mxu0 0
  %186 = vmatpush1.bf16.xpose.msra.mxu0 %v162
  %187 = vmatprep.subr.bf16.mxu0 0
  %188 = vmatpush1.bf16.xpose.msra.mxu0 0
  %189 = vmatprep.subr.bf16.mxu0 0
  %190 = vmatpush1.bf16.xpose.msra.mxu0 0
  %191 = vmatprep.subr.bf16.mxu0 0
  %192 = vmatpush1.bf16.xpose.msra.mxu0 0
  %193 = vmatprep.subr.bf16.mxu0 0
  %194 = vmatpush1.bf16.xpose.msra.mxu0 0
  %195 = vmatprep.subr.bf16.mxu0 0
  %196 = vmatpush1.bf16.xpose.msra.mxu0 0
  %197 = vmatprep.subr.bf16.mxu0 0
  %198 = vmatpush1.bf16.xpose.msra.mxu0 0
  %199 = vmatprep.subr.bf16.mxu0 0
  %200 = vmatpush1.bf16.xpose.msra.mxu0 0
  %201 = vmatprep.subr.bf16.mxu0 0
  %202 = vmatpush1.bf16.xpose.msra.mxu0 0
  %203 = vmatprep.mubr.bf16.mxu0 0
  %204 = vmatmul.mubr.bf16.gmra.mrb[0].mxu0 %v107
  %v205 = vpop.f32.mrb[0].mxu0
  %v206 = vadd.f32 0.0, %v205
  %v207 = vpop.f32.mrb[0].mxu0
  %v208 = vpop.f32.mrb[0].mxu0
  %v209 = vadd.f32 0.0, %v208
  %v210 = vpop.f32.mrb[0].mxu0
  %211 = vmatprep.mubr.bf16.mxu0 0
  %212 = vmatmul.mubr.bf16.gmra.mrb[0].mxu0 %v108
  %v213 = vpop.f32.mrb[0].mxu0
  %v214 = vadd.f32 0.0, %v213
  %v215 = vpop.f32.mrb[0].mxu0
  %v216 = vpop.f32.mrb[0].mxu0
  %v217 = vadd.f32 0.0, %v216
  %v218 = vpop.f32.mrb[0].mxu0
  %219 = vmatprep.mubr.bf16.mxu0 0
  %220 = vmatmul.mubr.bf16.gmra.mrb[0].mxu0 %v109
  %v221 = vpop.f32.mrb[0].mxu0
  %v222 = vadd.f32 0.0, %v221
  %v223 = vpop.f32.mrb[0].mxu0
  %v224 = vpop.f32.mrb[0].mxu0
  %v225 = vadd.f32 0.0, %v224
  %v226 = vpop.f32.mrb[0].mxu0
  %227 = vmatprep.mubr.bf16.mxu0 0
  %228 = vmatmul.mubr.bf16.gmra.mrb[0].mxu0 %v110
  %v229 = vpop.f32.mrb[0].mxu0
  %v230 = vadd.f32 0.0, %v229
  %v231 = vpop.f32.mrb[0].mxu0
  %v232 = vpop.f32.mrb[0].mxu0
  %v233 = vadd.f32 0.0, %v232
  %v234 = vpop.f32.mrb[0].mxu0
  %235 = vmatprep.mubr.bf16.mxu0 0
  %236 = vmatmul.mubr.bf16.gmra.mrb[0].mxu0 %v111
  %v237 = vpop.f32.mrb[0].mxu0
  %v238 = vadd.f32 0.0, %v237
  %v239 = vpop.f32.mrb[0].mxu0
  %v240 = vpop.f32.mrb[0].mxu0
  %v241 = vadd.f32 0.0, %v240
  %v242 = vpop.f32.mrb[0].mxu0
  %243 = vmatprep.mubr.bf16.mxu0 0
  %244 = vmatmul.mubr.bf16.gmra.mrb[0].mxu0 %v112
  %v245 = vpop.f32.mrb[0].mxu0
  %v246 = vadd.f32 0.0, %v245
  %v247 = vpop.f32.mrb[0].mxu0
  %v248 = vpop.f32.mrb[0].mxu0
  %v249 = vadd.f32 0.0, %v248
  %v250 = vpop.f32.mrb[0].mxu0
  %251 = vmatprep.mubr.bf16.mxu0 0
  %252 = vmatmul.mubr.bf16.gmra.mrb[0].mxu0 %v113
  %v253 = vpop.f32.mrb[0].mxu0
  %v254 = vadd.f32 0.0, %v253
  %v255 = vpop.f32.mrb[0].mxu0
  %v256 = vpop.f32.mrb[0].mxu0
  %v257 = vadd.f32 0.0, %v256
  %v258 = vpop.f32.mrb[0].mxu0
  %259 = vmatprep.mubr.bf16.mxu0 0
  %260 = vmatmul.mubr.bf16.gmra.mrb[0].mxu0 %v114
  %v261 = vpop.f32.mrb[0].mxu0
  %v262 = vadd.f32 0.0, %v261
  %v263 = vpop.f32.mrb[0].mxu0
  %v264 = vpop.f32.mrb[0].mxu0
  %v265 = vadd.f32 0.0, %v264
  %v266 = vpop.f32.mrb[0].mxu0
  %267 = vdwg.mxu0
  %v268 = vlaneseq
  %v269 = vshrl.u32 %v268, 7
  %v270 = vadd.s32 %v269, 8
  %v271 = vadd.s32 %v269, 16
  %v272 = vadd.s32 %v269, 24
  %v273 = vadd.s32 %v269, 32
  %v274 = vadd.s32 %v269, 40
  %v275 = vadd.s32 %v269, 48
  %v276 = vadd.s32 %v269, 56
  %v277 = vadd.s32 %v269, 64
  %v278 = vadd.s32 %v269, 72
  %v279 = vadd.s32 %v269, 80
  %v280 = vadd.s32 %v269, 88
  %v281 = vadd.s32 %v269, 96
  %v282 = vadd.s32 %v269, 104
  %v283 = vadd.s32 %v269, 112
  %v284 = vadd.s32 %v269, 120
  %v285 = vstv %s22
  %v286 = vadd.s32 %v285, %v269
  %v287 = vadd.s32 %v285, %v270
  %v288 = vadd.s32 %v285, %v271
  %v289 = vadd.s32 %v285, %v272
  %v290 = vadd.s32 %v285, %v273
  %v291 = vadd.s32 %v285, %v274
  %v292 = vadd.s32 %v285, %v275
  %v293 = vadd.s32 %v285, %v276
  %v294 = vadd.s32 %v285, %v277
  %v295 = vadd.s32 %v285, %v278
  %v296 = vadd.s32 %v285, %v279
  %v297 = vadd.s32 %v285, %v280
  %v298 = vadd.s32 %v285, %v281
  %v299 = vadd.s32 %v285, %v282
  %v300 = vadd.s32 %v285, %v283
  %v301 = vadd.s32 %v285, %v284
  %v302 = vlaneseq
  %v303 = vand.u32 %v302, 127
  %vm304 = vcmp.lt.s32.totalorder %v303, 24
  %vm305 = vcmp.ne.s32.totalorder %v286, %v303
  %vm306 = vcmp.ne.s32.totalorder %v287, %v303
  %vm307 = vcmp.ne.s32.totalorder %v288, %v303
  %vm308 = vcmp.ne.s32.totalorder %v289, %v303
  %vm309 = vcmp.ne.s32.totalorder %v290, %v303
  %vm310 = vcmp.ne.s32.totalorder %v291, %v303
  %vm311 = vcmp.ne.s32.totalorder %v292, %v303
  %vm312 = vcmp.ne.s32.totalorder %v293, %v303
  %vm313 = vcmp.ne.s32.totalorder %v294, %v303
  %vm314 = vcmp.ne.s32.totalorder %v295, %v303
  %vm315 = vcmp.ne.s32.totalorder %v296, %v303
  %vm316 = vcmp.ne.s32.totalorder %v297, %v303
  %vm317 = vcmp.ne.s32.totalorder %v298, %v303
  %vm318 = vcmp.ne.s32.totalorder %v299, %v303
  %vm319 = vcmp.ne.s32.totalorder %v300, %v303
  %vm320 = vcmp.ne.s32.totalorder %v301, %v303
  %vm321 = vmand %vm305, %vm304
  %vm322 = vmand %vm306, %vm304
  %vm323 = vmand %vm307, %vm304
  %vm324 = vmand %vm308, %vm304
  %vm325 = vmand %vm309, %vm304
  %vm326 = vmand %vm310, %vm304
  %vm327 = vmand %vm311, %vm304
  %vm328 = vmand %vm312, %vm304
  %vm329 = vmand %vm313, %vm304
  %vm330 = vmand %vm314, %vm304
  %vm331 = vmand %vm315, %vm304
  %vm332 = vmand %vm316, %vm304
  %vm333 = vmand %vm317, %vm304
  %vm334 = vmand %vm318, %vm304
  %vm335 = vmand %vm319, %vm304
  %vm336 = vmand %vm320, %vm304
  %v337 = vld [vmem:[%s1] sm:$0xff]
  %v338 = vld [vmem:[%s1 + $0x8] sm:$0xff]
  %v339 = vld [vmem:[%s1 + $0x10] sm:$0xff]
  %v340 = vld [vmem:[%s1 + $0x18] sm:$0xff]
  %v341 = vld [vmem:[%s1 + $0x20] sm:$0xff]
  %v342 = vld [vmem:[%s1 + $0x28] sm:$0xff]
  %v343 = vld [vmem:[%s1 + $0x30] sm:$0xff]
  %v344 = vld [vmem:[%s1 + $0x38] sm:$0xff]
  %v345 = vld [vmem:[%s1 + $0x40] sm:$0xff]
  %v346 = vld [vmem:[%s1 + $0x48] sm:$0xff]
  %v347 = vld [vmem:[%s1 + $0x50] sm:$0xff]
  %v348 = vld [vmem:[%s1 + $0x58] sm:$0xff]
  %v349 = vld [vmem:[%s1 + $0x60] sm:$0xff]
  %v350 = vld [vmem:[%s1 + $0x68] sm:$0xff]
  %v351 = vld [vmem:[%s1 + $0x70] sm:$0xff]
  %v352 = vld [vmem:[%s1 + $0x78] sm:$0xff]
  %v353 = vld [vmem:[%s2] sm:$0x1]
  %354 = vset.pattern.permute.xlu0 0
  %355 = vperm.xlu0 %354, %v337
  %v356 = vpop.permute.xlu0 %355
  %357 = vset.pattern.permute.xlu0 0
  %358 = vperm.xlu0 %357, %v338
  %v359 = vpop.permute.xlu0 %358
  %360 = vset.pattern.permute.xlu0 0
  %361 = vperm.xlu0 %360, %v339
  %v362 = vpop.permute.xlu0 %361
  %363 = vset.pattern.permute.xlu0 0
  %364 = vperm.xlu0 %363, %v340
  %v365 = vpop.permute.xlu0 %364
  %366 = vset.pattern.permute.xlu0 0
  %367 = vperm.xlu0 %366, %v341
  %v368 = vpop.permute.xlu0 %367
  %369 = vset.pattern.permute.xlu0 0
  %370 = vperm.xlu0 %369, %v342
  %v371 = vpop.permute.xlu0 %370
  %372 = vset.pattern.permute.xlu0 0
  %373 = vperm.xlu0 %372, %v343
  %v374 = vpop.permute.xlu0 %373
  %375 = vset.pattern.permute.xlu0 0
  %376 = vperm.xlu0 %375, %v344
  %v377 = vpop.permute.xlu0 %376
  %378 = vset.pattern.permute.xlu0 0
  %379 = vperm.xlu0 %378, %v345
  %v380 = vpop.permute.xlu0 %379
  %381 = vset.pattern.permute.xlu0 0
  %382 = vperm.xlu0 %381, %v346
  %v383 = vpop.permute.xlu0 %382
  %384 = vset.pattern.permute.xlu0 0
  %385 = vperm.xlu0 %384, %v347
  %v386 = vpop.permute.xlu0 %385
  %387 = vset.pattern.permute.xlu0 0
  %388 = vperm.xlu0 %387, %v348
  %v389 = vpop.permute.xlu0 %388
  %390 = vset.pattern.permute.xlu0 0
  %391 = vperm.xlu0 %390, %v349
  %v392 = vpop.permute.xlu0 %391
  %393 = vset.pattern.permute.xlu0 0
  %394 = vperm.xlu0 %393, %v350
  %v395 = vpop.permute.xlu0 %394
  %396 = vset.pattern.permute.xlu0 0
  %397 = vperm.xlu0 %396, %v351
  %v398 = vpop.permute.xlu0 %397
  %399 = vset.pattern.permute.xlu0 0
  %400 = vperm.xlu0 %399, %v352
  %v401 = vpop.permute.xlu0 %400
  %v402 = vlaneseq
  %v403 = vshrl.u32 %v402, 7
  %v404 = vsub.s32 0, %v403
  %v405 = vrot.slane %v353, %v404
  %vm406 = vcmp.eq.s32.totalorder %v356, %v405
  %vm407 = vcmp.eq.s32.totalorder %v359, %v405
  %vm408 = vcmp.eq.s32.totalorder %v362, %v405
  %vm409 = vcmp.eq.s32.totalorder %v365, %v405
  %vm410 = vcmp.eq.s32.totalorder %v368, %v405
  %vm411 = vcmp.eq.s32.totalorder %v371, %v405
  %vm412 = vcmp.eq.s32.totalorder %v374, %v405
  %vm413 = vcmp.eq.s32.totalorder %v377, %v405
  %vm414 = vcmp.eq.s32.totalorder %v380, %v405
  %vm415 = vcmp.eq.s32.totalorder %v383, %v405
  %vm416 = vcmp.eq.s32.totalorder %v386, %v405
  %vm417 = vcmp.eq.s32.totalorder %v389, %v405
  %vm418 = vcmp.eq.s32.totalorder %v392, %v405
  %vm419 = vcmp.eq.s32.totalorder %v395, %v405
  %vm420 = vcmp.eq.s32.totalorder %v398, %v405
  %vm421 = vcmp.eq.s32.totalorder %v401, %v405
  %vm422 = vmand %vm406, %vm321
  %vm423 = vmand %vm407, %vm322
  %vm424 = vmand %vm408, %vm323
  %vm425 = vmand %vm409, %vm324
  %vm426 = vmand %vm410, %vm325
  %vm427 = vmand %vm411, %vm326
  %vm428 = vmand %vm412, %vm327
  %vm429 = vmand %vm413, %vm328
  %vm430 = vmand %vm414, %vm329
  %vm431 = vmand %vm415, %vm330
  %vm432 = vmand %vm416, %vm331
  %vm433 = vmand %vm417, %vm332
  %vm434 = vmand %vm418, %vm333
  %vm435 = vmand %vm419, %vm334
  %vm436 = vmand %vm420, %vm335
  %vm437 = vmand %vm421, %vm336
  %v438 = vsel %vm422, 1.0, 0.0
  %v439 = vsel %vm423, 1.0, 0.0
  %v440 = vsel %vm424, 1.0, 0.0
  %v441 = vsel %vm425, 1.0, 0.0
  %v442 = vsel %vm426, 1.0, 0.0
  %v443 = vsel %vm427, 1.0, 0.0
  %v444 = vsel %vm428, 1.0, 0.0
  %v445 = vsel %vm429, 1.0, 0.0
  %v446 = vsel %vm430, 1.0, 0.0
  %v447 = vsel %vm431, 1.0, 0.0
  %v448 = vsel %vm432, 1.0, 0.0
  %v449 = vsel %vm433, 1.0, 0.0
  %v450 = vsel %vm434, 1.0, 0.0
  %v451 = vsel %vm435, 1.0, 0.0
  %v452 = vsel %vm436, 1.0, 0.0
  %v453 = vsel %vm437, 1.0, 0.0
  %v454 = vsel %vm304, %v206, -1e+30
  %v455 = vsel %vm304, %v209, -1e+30
  %v456 = vsel %vm304, %v214, -1e+30
  %v457 = vsel %vm304, %v217, -1e+30
  %v458 = vsel %vm304, %v222, -1e+30
  %v459 = vsel %vm304, %v225, -1e+30
  %v460 = vsel %vm304, %v230, -1e+30
  %v461 = vsel %vm304, %v233, -1e+30
  %v462 = vsel %vm304, %v238, -1e+30
  %v463 = vsel %vm304, %v241, -1e+30
  %v464 = vsel %vm304, %v246, -1e+30
  %v465 = vsel %vm304, %v249, -1e+30
  %v466 = vsel %vm304, %v254, -1e+30
  %v467 = vsel %vm304, %v257, -1e+30
  %v468 = vsel %vm304, %v262, -1e+30
  %v469 = vsel %vm304, %v265, -1e+30
  %470 = vmax.xlane.f32.xlu0 %v454
  %v471 = vpop.xlane.xlu0 %470
  %472 = vmax.xlane.f32.xlu0 %v455
  %v473 = vpop.xlane.xlu0 %472
  %474 = vmax.xlane.f32.xlu0 %v456
  %v475 = vpop.xlane.xlu0 %474
  %476 = vmax.xlane.f32.xlu0 %v457
  %v477 = vpop.xlane.xlu0 %476
  %478 = vmax.xlane.f32.xlu0 %v458
  %v479 = vpop.xlane.xlu0 %478
  %480 = vmax.xlane.f32.xlu0 %v459
  %v481 = vpop.xlane.xlu0 %480
  %482 = vmax.xlane.f32.xlu0 %v460
  %v483 = vpop.xlane.xlu0 %482
  %484 = vmax.xlane.f32.xlu0 %v461
  %v485 = vpop.xlane.xlu0 %484
  %486 = vmax.xlane.f32.xlu0 %v462
  %v487 = vpop.xlane.xlu0 %486
  %488 = vmax.xlane.f32.xlu0 %v463
  %v489 = vpop.xlane.xlu0 %488
  %490 = vmax.xlane.f32.xlu0 %v464
  %v491 = vpop.xlane.xlu0 %490
  %492 = vmax.xlane.f32.xlu0 %v465
  %v493 = vpop.xlane.xlu0 %492
  %494 = vmax.xlane.f32.xlu0 %v466
  %v495 = vpop.xlane.xlu0 %494
  %496 = vmax.xlane.f32.xlu0 %v467
  %v497 = vpop.xlane.xlu0 %496
  %498 = vmax.xlane.f32.xlu0 %v468
  %v499 = vpop.xlane.xlu0 %498
  %500 = vmax.xlane.f32.xlu0 %v469
  %v501 = vpop.xlane.xlu0 %500
  %v502 = vsub.f32 %v206, %v471
  %v503 = vsub.f32 %v209, %v473
  %v504 = vsub.f32 %v214, %v475
  %v505 = vsub.f32 %v217, %v477
  %v506 = vsub.f32 %v222, %v479
  %v507 = vsub.f32 %v225, %v481
  %v508 = vsub.f32 %v230, %v483
  %v509 = vsub.f32 %v233, %v485
  %v510 = vsub.f32 %v238, %v487
  %v511 = vsub.f32 %v241, %v489
  %v512 = vsub.f32 %v246, %v491
  %v513 = vsub.f32 %v249, %v493
  %v514 = vsub.f32 %v254, %v495
  %v515 = vsub.f32 %v257, %v497
  %v516 = vsub.f32 %v262, %v499
  %v517 = vsub.f32 %v265, %v501
  %v518 = vmul.f32 %v502, 1.442695
  %v519 = vpow.pop %v518
  %v520 = vmul.f32 %v503, 1.442695
  %v521 = vpow.pop %v520
  %v522 = vmul.f32 %v504, 1.442695
  %v523 = vpow.pop %v522
  %v524 = vmul.f32 %v505, 1.442695
  %v525 = vpow.pop %v524
  %v526 = vmul.f32 %v506, 1.442695
  %v527 = vpow.pop %v526
  %v528 = vmul.f32 %v507, 1.442695
  %v529 = vpow.pop %v528
  %v530 = vmul.f32 %v508, 1.442695
  %v531 = vpow.pop %v530
  %v532 = vmul.f32 %v509, 1.442695
  %v533 = vpow.pop %v532
  %v534 = vmul.f32 %v510, 1.442695
  %v535 = vpow.pop %v534
  %v536 = vmul.f32 %v511, 1.442695
  %v537 = vpow.pop %v536
  %v538 = vmul.f32 %v512, 1.442695
  %v539 = vpow.pop %v538
  %v540 = vmul.f32 %v513, 1.442695
  %v541 = vpow.pop %v540
  %v542 = vmul.f32 %v514, 1.442695
  %v543 = vpow.pop %v542
  %v544 = vmul.f32 %v515, 1.442695
  %v545 = vpow.pop %v544
  %v546 = vmul.f32 %v516, 1.442695
  %v547 = vpow.pop %v546
  %v548 = vmul.f32 %v517, 1.442695
  %v549 = vpow.pop %v548
  %v550 = vsel %vm321, %v519, 0.0
  %v551 = vsel %vm322, %v521, 0.0
  %v552 = vsel %vm323, %v523, 0.0
  %v553 = vsel %vm324, %v525, 0.0
  %v554 = vsel %vm325, %v527, 0.0
  %v555 = vsel %vm326, %v529, 0.0
  %v556 = vsel %vm327, %v531, 0.0
  %v557 = vsel %vm328, %v533, 0.0
  %v558 = vsel %vm329, %v535, 0.0
  %v559 = vsel %vm330, %v537, 0.0
  %v560 = vsel %vm331, %v539, 0.0
  %v561 = vsel %vm332, %v541, 0.0
  %v562 = vsel %vm333, %v543, 0.0
  %v563 = vsel %vm334, %v545, 0.0
  %v564 = vsel %vm335, %v547, 0.0
  %v565 = vsel %vm336, %v549, 0.0
  %v566 = vld [vmem:[%s3] sm:$0x1]
  %v567 = vld [vmem:[%s4] sm:$0x1]
  %v569 = vlaneseq
  %v570 = vshrl.u32 %v569, 7
  %v571 = vsub.s32 0, %v570
  %v572 = vrot.slane %v567, %v571
  %v574 = vmul.f32 %v438, %v572
  %v575 = vmul.f32 %v439, %v572
  %v576 = vmul.f32 %v440, %v572
  %v577 = vmul.f32 %v441, %v572
  %v578 = vmul.f32 %v442, %v572
  %v579 = vmul.f32 %v443, %v572
  %v580 = vmul.f32 %v444, %v572
  %v581 = vmul.f32 %v445, %v572
  %v582 = vmul.f32 %v446, %v572
  %v583 = vmul.f32 %v447, %v572
  %v584 = vmul.f32 %v448, %v572
  %v585 = vmul.f32 %v449, %v572
  %v586 = vmul.f32 %v450, %v572
  %v587 = vmul.f32 %v451, %v572
  %v588 = vmul.f32 %v452, %v572
  %v589 = vmul.f32 %v453, %v572
  %v591 = vlaneseq
  %v592 = vshrl.u32 %v591, 7
  %v593 = vsub.s32 0, %v592
  %v594 = vrot.slane %v566, %v593
  %v596 = vadd.f32 %v594, %v574
  %v597 = vadd.f32 %v594, %v575
  %v598 = vadd.f32 %v594, %v576
  %v599 = vadd.f32 %v594, %v577
  %v600 = vadd.f32 %v594, %v578
  %v601 = vadd.f32 %v594, %v579
  %v602 = vadd.f32 %v594, %v580
  %v603 = vadd.f32 %v594, %v581
  %v604 = vadd.f32 %v594, %v582
  %v605 = vadd.f32 %v594, %v583
  %v606 = vadd.f32 %v594, %v584
  %v607 = vadd.f32 %v594, %v585
  %v608 = vadd.f32 %v594, %v586
  %v609 = vadd.f32 %v594, %v587
  %v610 = vadd.f32 %v594, %v588
  %v611 = vadd.f32 %v594, %v589
  %v612 = vmul.f32 %v550, %v596
  %v613 = vmul.f32 %v551, %v597
  %v614 = vmul.f32 %v552, %v598
  %v615 = vmul.f32 %v553, %v599
  %v616 = vmul.f32 %v554, %v600
  %v617 = vmul.f32 %v555, %v601
  %v618 = vmul.f32 %v556, %v602
  %v619 = vmul.f32 %v557, %v603
  %v620 = vmul.f32 %v558, %v604
  %v621 = vmul.f32 %v559, %v605
  %v622 = vmul.f32 %v560, %v606
  %v623 = vmul.f32 %v561, %v607
  %v624 = vmul.f32 %v562, %v608
  %v625 = vmul.f32 %v563, %v609
  %v626 = vmul.f32 %v564, %v610
  %v627 = vmul.f32 %v565, %v611
  %628 = vadd.xlane.f32.xlu0 %v612
  %v629 = vpop.xlane.xlu0 %628
  %630 = vadd.xlane.f32.xlu0 %v613
  %v631 = vpop.xlane.xlu0 %630
  %632 = vadd.xlane.f32.xlu0 %v614
  %v633 = vpop.xlane.xlu0 %632
  %634 = vadd.xlane.f32.xlu0 %v615
  %v635 = vpop.xlane.xlu0 %634
  %636 = vadd.xlane.f32.xlu0 %v616
  %v637 = vpop.xlane.xlu0 %636
  %638 = vadd.xlane.f32.xlu0 %v617
  %v639 = vpop.xlane.xlu0 %638
  %640 = vadd.xlane.f32.xlu0 %v618
  %v641 = vpop.xlane.xlu0 %640
  %642 = vadd.xlane.f32.xlu0 %v619
  %v643 = vpop.xlane.xlu0 %642
  %644 = vadd.xlane.f32.xlu0 %v620
  %v645 = vpop.xlane.xlu0 %644
  %646 = vadd.xlane.f32.xlu0 %v621
  %v647 = vpop.xlane.xlu0 %646
  %648 = vadd.xlane.f32.xlu0 %v622
  %v649 = vpop.xlane.xlu0 %648
  %650 = vadd.xlane.f32.xlu0 %v623
  %v651 = vpop.xlane.xlu0 %650
  %652 = vadd.xlane.f32.xlu0 %v624
  %v653 = vpop.xlane.xlu0 %652
  %654 = vadd.xlane.f32.xlu0 %v625
  %v655 = vpop.xlane.xlu0 %654
  %656 = vadd.xlane.f32.xlu0 %v626
  %v657 = vpop.xlane.xlu0 %656
  %658 = vadd.xlane.f32.xlu0 %v627
  %v659 = vpop.xlane.xlu0 %658
  %v660 = vlog2.pop %v629
  %v661 = vmul.f32 %v660, 0.6931472
  %v662 = vlog2.pop %v631
  %v663 = vmul.f32 %v662, 0.6931472
  %v664 = vlog2.pop %v633
  %v665 = vmul.f32 %v664, 0.6931472
  %v666 = vlog2.pop %v635
  %v667 = vmul.f32 %v666, 0.6931472
  %v668 = vlog2.pop %v637
  %v669 = vmul.f32 %v668, 0.6931472
  %v670 = vlog2.pop %v639
  %v671 = vmul.f32 %v670, 0.6931472
  %v672 = vlog2.pop %v641
  %v673 = vmul.f32 %v672, 0.6931472
  %v674 = vlog2.pop %v643
  %v675 = vmul.f32 %v674, 0.6931472
  %v676 = vlog2.pop %v645
  %v677 = vmul.f32 %v676, 0.6931472
  %v678 = vlog2.pop %v647
  %v679 = vmul.f32 %v678, 0.6931472
  %v680 = vlog2.pop %v649
  %v681 = vmul.f32 %v680, 0.6931472
  %v682 = vlog2.pop %v651
  %v683 = vmul.f32 %v682, 0.6931472
  %v684 = vlog2.pop %v653
  %v685 = vmul.f32 %v684, 0.6931472
  %v686 = vlog2.pop %v655
  %v687 = vmul.f32 %v686, 0.6931472
  %v688 = vlog2.pop %v657
  %v689 = vmul.f32 %v688, 0.6931472
  %v690 = vlog2.pop %v659
  %v691 = vmul.f32 %v690, 0.6931472
  %v692 = vmul.f32 %v438, %v502
  %v693 = vmul.f32 %v439, %v503
  %v694 = vmul.f32 %v440, %v504
  %v695 = vmul.f32 %v441, %v505
  %v696 = vmul.f32 %v442, %v506
  %v697 = vmul.f32 %v443, %v507
  %v698 = vmul.f32 %v444, %v508
  %v699 = vmul.f32 %v445, %v509
  %v700 = vmul.f32 %v446, %v510
  %v701 = vmul.f32 %v447, %v511
  %v702 = vmul.f32 %v448, %v512
  %v703 = vmul.f32 %v449, %v513
  %v704 = vmul.f32 %v450, %v514
  %v705 = vmul.f32 %v451, %v515
  %v706 = vmul.f32 %v452, %v516
  %v707 = vmul.f32 %v453, %v517
  %708 = vadd.xlane.f32.xlu0 %v692
  %v709 = vpop.xlane.xlu0 %708
  %710 = vadd.xlane.f32.xlu0 %v693
  %v711 = vpop.xlane.xlu0 %710
  %712 = vadd.xlane.f32.xlu0 %v694
  %v713 = vpop.xlane.xlu0 %712
  %714 = vadd.xlane.f32.xlu0 %v695
  %v715 = vpop.xlane.xlu0 %714
  %716 = vadd.xlane.f32.xlu0 %v696
  %v717 = vpop.xlane.xlu0 %716
  %718 = vadd.xlane.f32.xlu0 %v697
  %v719 = vpop.xlane.xlu0 %718
  %720 = vadd.xlane.f32.xlu0 %v698
  %v721 = vpop.xlane.xlu0 %720
  %722 = vadd.xlane.f32.xlu0 %v699
  %v723 = vpop.xlane.xlu0 %722
  %724 = vadd.xlane.f32.xlu0 %v700
  %v725 = vpop.xlane.xlu0 %724
  %726 = vadd.xlane.f32.xlu0 %v701
  %v727 = vpop.xlane.xlu0 %726
  %728 = vadd.xlane.f32.xlu0 %v702
  %v729 = vpop.xlane.xlu0 %728
  %730 = vadd.xlane.f32.xlu0 %v703
  %v731 = vpop.xlane.xlu0 %730
  %732 = vadd.xlane.f32.xlu0 %v704
  %v733 = vpop.xlane.xlu0 %732
  %734 = vadd.xlane.f32.xlu0 %v705
  %v735 = vpop.xlane.xlu0 %734
  %736 = vadd.xlane.f32.xlu0 %v706
  %v737 = vpop.xlane.xlu0 %736
  %738 = vadd.xlane.f32.xlu0 %v707
  %v739 = vpop.xlane.xlu0 %738
  %740 = vadd.xlane.f32.xlu0 %v438
  %v741 = vpop.xlane.xlu0 %740
  %742 = vadd.xlane.f32.xlu0 %v439
  %v743 = vpop.xlane.xlu0 %742
  %744 = vadd.xlane.f32.xlu0 %v440
  %v745 = vpop.xlane.xlu0 %744
  %746 = vadd.xlane.f32.xlu0 %v441
  %v747 = vpop.xlane.xlu0 %746
  %748 = vadd.xlane.f32.xlu0 %v442
  %v749 = vpop.xlane.xlu0 %748
  %750 = vadd.xlane.f32.xlu0 %v443
  %v751 = vpop.xlane.xlu0 %750
  %752 = vadd.xlane.f32.xlu0 %v444
  %v753 = vpop.xlane.xlu0 %752
  %754 = vadd.xlane.f32.xlu0 %v445
  %v755 = vpop.xlane.xlu0 %754
  %756 = vadd.xlane.f32.xlu0 %v446
  %v757 = vpop.xlane.xlu0 %756
  %758 = vadd.xlane.f32.xlu0 %v447
  %v759 = vpop.xlane.xlu0 %758
  %760 = vadd.xlane.f32.xlu0 %v448
  %v761 = vpop.xlane.xlu0 %760
  %762 = vadd.xlane.f32.xlu0 %v449
  %v763 = vpop.xlane.xlu0 %762
  %764 = vadd.xlane.f32.xlu0 %v450
  %v765 = vpop.xlane.xlu0 %764
  %766 = vadd.xlane.f32.xlu0 %v451
  %v767 = vpop.xlane.xlu0 %766
  %768 = vadd.xlane.f32.xlu0 %v452
  %v769 = vpop.xlane.xlu0 %768
  %770 = vadd.xlane.f32.xlu0 %v453
  %v771 = vpop.xlane.xlu0 %770
  %v772 = vmul.f32 %v661, %v741
  %v773 = vmul.f32 %v663, %v743
  %v774 = vmul.f32 %v665, %v745
  %v775 = vmul.f32 %v667, %v747
  %v776 = vmul.f32 %v669, %v749
  %v777 = vmul.f32 %v671, %v751
  %v778 = vmul.f32 %v673, %v753
  %v779 = vmul.f32 %v675, %v755
  %v780 = vmul.f32 %v677, %v757
  %v781 = vmul.f32 %v679, %v759
  %v782 = vmul.f32 %v681, %v761
  %v783 = vmul.f32 %v683, %v763
  %v784 = vmul.f32 %v685, %v765
  %v785 = vmul.f32 %v687, %v767
  %v786 = vmul.f32 %v689, %v769
  %v787 = vmul.f32 %v691, %v771
  %v788 = vsub.f32 %v709, %v772
  %v789 = vsub.f32 %v711, %v773
  %v790 = vsub.f32 %v713, %v774
  %v791 = vsub.f32 %v715, %v775
  %v792 = vsub.f32 %v717, %v776
  %v793 = vsub.f32 %v719, %v777
  %v794 = vsub.f32 %v721, %v778
  %v795 = vsub.f32 %v723, %v779
  %v796 = vsub.f32 %v725, %v780
  %v797 = vsub.f32 %v727, %v781
  %v798 = vsub.f32 %v729, %v782
  %v799 = vsub.f32 %v731, %v783
  %v800 = vsub.f32 %v733, %v784
  %v801 = vsub.f32 %v735, %v785
  %v802 = vsub.f32 %v737, %v786
  %v803 = vsub.f32 %v739, %v787
  %v804 = vmax.f32 %v741, 1.0
  %v805 = vmax.f32 %v743, 1.0
  %v806 = vmax.f32 %v745, 1.0
  %v807 = vmax.f32 %v747, 1.0
  %v808 = vmax.f32 %v749, 1.0
  %v809 = vmax.f32 %v751, 1.0
  %v810 = vmax.f32 %v753, 1.0
  %v811 = vmax.f32 %v755, 1.0
  %v812 = vmax.f32 %v757, 1.0
  %v813 = vmax.f32 %v759, 1.0
  %v814 = vmax.f32 %v761, 1.0
  %v815 = vmax.f32 %v763, 1.0
  %v816 = vmax.f32 %v765, 1.0
  %v817 = vmax.f32 %v767, 1.0
  %v818 = vmax.f32 %v769, 1.0
  %v819 = vmax.f32 %v771, 1.0
  %v820 = vrcp.pop %v804
  %v821 = vmul.f32 %v788, %v820
  %v822 = vrcp.pop %v805
  %v823 = vmul.f32 %v789, %v822
  %v824 = vrcp.pop %v806
  %v825 = vmul.f32 %v790, %v824
  %v826 = vrcp.pop %v807
  %v827 = vmul.f32 %v791, %v826
  %v828 = vrcp.pop %v808
  %v829 = vmul.f32 %v792, %v828
  %v830 = vrcp.pop %v809
  %v831 = vmul.f32 %v793, %v830
  %v832 = vrcp.pop %v810
  %v833 = vmul.f32 %v794, %v832
  %v834 = vrcp.pop %v811
  %v835 = vmul.f32 %v795, %v834
  %v836 = vrcp.pop %v812
  %v837 = vmul.f32 %v796, %v836
  %v838 = vrcp.pop %v813
  %v839 = vmul.f32 %v797, %v838
  %v840 = vrcp.pop %v814
  %v841 = vmul.f32 %v798, %v840
  %v842 = vrcp.pop %v815
  %v843 = vmul.f32 %v799, %v842
  %v844 = vrcp.pop %v816
  %v845 = vmul.f32 %v800, %v844
  %v846 = vrcp.pop %v817
  %v847 = vmul.f32 %v801, %v846
  %v848 = vrcp.pop %v818
  %v849 = vmul.f32 %v802, %v848
  %v850 = vrcp.pop %v819
  %v851 = vmul.f32 %v803, %v850
  %vm852 = vcmp.lt.s32.totalorder %v286, 24
  %vm853 = vcmp.lt.s32.totalorder %v287, 24
  %vm854 = vcmp.lt.s32.totalorder %v288, 24
  %vm855 = vcmp.lt.s32.totalorder %v289, 24
  %vm856 = vcmp.lt.s32.totalorder %v290, 24
  %vm857 = vcmp.lt.s32.totalorder %v291, 24
  %vm858 = vcmp.lt.s32.totalorder %v292, 24
  %vm859 = vcmp.lt.s32.totalorder %v293, 24
  %vm860 = vcmp.lt.s32.totalorder %v294, 24
  %vm861 = vcmp.lt.s32.totalorder %v295, 24
  %vm862 = vcmp.lt.s32.totalorder %v296, 24
  %vm863 = vcmp.lt.s32.totalorder %v297, 24
  %vm864 = vcmp.lt.s32.totalorder %v298, 24
  %vm865 = vcmp.lt.s32.totalorder %v299, 24
  %vm866 = vcmp.lt.s32.totalorder %v300, 24
  %vm867 = vcmp.lt.s32.totalorder %v301, 24
  %v868 = vsel %vm852, %v821, 0.0
  %v869 = vsel %vm853, %v823, 0.0
  %v870 = vsel %vm854, %v825, 0.0
  %v871 = vsel %vm855, %v827, 0.0
  %v872 = vsel %vm856, %v829, 0.0
  %v873 = vsel %vm857, %v831, 0.0
  %v874 = vsel %vm858, %v833, 0.0
  %v875 = vsel %vm859, %v835, 0.0
  %v876 = vsel %vm860, %v837, 0.0
  %v877 = vsel %vm861, %v839, 0.0
  %v878 = vsel %vm862, %v841, 0.0
  %v879 = vsel %vm863, %v843, 0.0
  %v880 = vsel %vm864, %v845, 0.0
  %v881 = vsel %vm865, %v847, 0.0
  %v882 = vsel %vm866, %v849, 0.0
  %v883 = vsel %vm867, %v851, 0.0
  %vm884 = vcmask 7168
  %885 = vst.msk [vmem:[%s5] sm:$0xff] %vm884, %v868
  %886 = vst.msk [vmem:[%s5 + $0x8] sm:$0xff] %vm884, %v869
  %887 = vst.msk [vmem:[%s5 + $0x10] sm:$0xff] %vm884, %v870
  %888 = vst.msk [vmem:[%s5 + $0x18] sm:$0xff] %vm884, %v871
  %889 = vst.msk [vmem:[%s5 + $0x20] sm:$0xff] %vm884, %v872
  %890 = vst.msk [vmem:[%s5 + $0x28] sm:$0xff] %vm884, %v873
  %891 = vst.msk [vmem:[%s5 + $0x30] sm:$0xff] %vm884, %v874
  %892 = vst.msk [vmem:[%s5 + $0x38] sm:$0xff] %vm884, %v875
  %893 = vst.msk [vmem:[%s5 + $0x40] sm:$0xff] %vm884, %v876
  %894 = vst.msk [vmem:[%s5 + $0x48] sm:$0xff] %vm884, %v877
  %895 = vst.msk [vmem:[%s5 + $0x50] sm:$0xff] %vm884, %v878
  %896 = vst.msk [vmem:[%s5 + $0x58] sm:$0xff] %vm884, %v879
  %897 = vst.msk [vmem:[%s5 + $0x60] sm:$0xff] %vm884, %v880
  %898 = vst.msk [vmem:[%s5 + $0x68] sm:$0xff] %vm884, %v881
  %899 = vst.msk [vmem:[%s5 + $0x70] sm:$0xff] %vm884, %v882
  %900 = vst.msk [vmem:[%s5 + $0x78] sm:$0xff] %vm884, %v883
  // Predicated region
  $region22: #{tpu_custom_call.1} parent=0 // pred_check
    _
  $region23: #{tpu_custom_call.1} parent=0 // pred_check_branch
    %902 = sbr.rel (0) target = $region25
  $region24: #{tpu_custom_call.1} parent=0 // pred_region
    _
  $region25: #{tpu_custom_call.1} parent=0 // pred_fallthru
    _
  // Predicated region
  $region26: #{tpu_custom_call.1} parent=0 // pred_check
    _
  $region27: #{tpu_custom_call.1} parent=0 // pred_check_branch
    %904 = sbr.rel (0) target = $region29
  $region28: #{tpu_custom_call.1} parent=0 // pred_region
    _
  $region29: #{tpu_custom_call.1} parent=0 // pred_fallthru
    _

// kernel: tpu_custom_call.1
$region0: #{tpu_custom_call.1}
  #allocation0 [shape = 'u32[]', space=smem, size = 0x4, offset = 0x4, fixed_abs, tag = 'smem constant byte address 0x4 - core index']
  #allocation1 [shape = 'u32[144,128]{1,0:T(1,128)}', space=vmem, size = 0x12000, scoped, tag = 'internal scratch']
  %s0 = inlined_call_operand.vmem [shape: bf16[128,128], index: 0, kind: input, shape index: {}]
  %s1 = inlined_call_operand.vmem [shape: s32[128,1], index: 1, kind: input, shape index: {}]
  %s2 = inlined_call_operand.vmem [shape: s32[1,128], index: 2, kind: input, shape index: {}]
  %s3 = inlined_call_operand.vmem [shape: f32[1,128], index: 3, kind: input, shape index: {}]
  %s4 = inlined_call_operand.vmem [shape: f32[1,128], index: 4, kind: input, shape index: {}]
  %s5 = inlined_call_operand.vmem [shape: f32[128,1], index: 5, kind: output, shape index: {}]
  %s6 = sld [smem:[#allocation0]]
  $region30: #{tpu_custom_call.1} parent=0
    _
  %s8 = ssub.s32 1, %s6
  %s9 = scalar_select 0, %s8, %s6
  // Predicated region
  $region2: #{tpu_custom_call.1} parent=0 // pred_check
    _
  $region3: #{tpu_custom_call.1} parent=0 // pred_check_branch
    %11 = sbr.rel (0) target = $region5
  $region4: #{tpu_custom_call.1} parent=0 // pred_region
    _
  $region5: #{tpu_custom_call.1} parent=0 // pred_fallthru
    _
  // Predicated region
  $region6: #{tpu_custom_call.1} parent=0 // pred_check
    _
  $region7: #{tpu_custom_call.1} parent=0 // pred_check_branch
    %13 = sbr.rel (0) target = $region9
  $region8: #{tpu_custom_call.1} parent=0 // pred_region
    _
  $region9: #{tpu_custom_call.1} parent=0 // pred_fallthru
    _
  // Predicated region
  $region10: #{tpu_custom_call.1} parent=0 // pred_check
    _
  $region11: #{tpu_custom_call.1} parent=0 // pred_check_branch
    %15 = sbr.rel (0) target = $region13
  $region12: #{tpu_custom_call.1} parent=0 // pred_region
    _
  $region13: #{tpu_custom_call.1} parent=0 // pred_fallthru
    _
  // Predicated region
  $region14: #{tpu_custom_call.1} parent=0 // pred_check
    _
  $region15: #{tpu_custom_call.1} parent=0 // pred_check_branch
    %17 = sbr.rel (0) target = $region17
  $region16: #{tpu_custom_call.1} parent=0 // pred_region
    _
  $region17: #{tpu_custom_call.1} parent=0 // pred_fallthru
    _
  // Predicated region
  $region18: #{tpu_custom_call.1} parent=0 // pred_check
    _
  $region19: #{tpu_custom_call.1} parent=0 // pred_check_branch
    %19 = sbr.rel (0) target = $region21
  $region20: #{tpu_custom_call.1} parent=0 // pred_region
    _
  $region21: #{tpu_custom_call.1} parent=0 // pred_fallthru
    _
  %s22 = smul.u32 0, 128
  %s23 = sshra.s32 %s22, 3
  %s24 = sand.u32 %s22, 7
  %s25 = smul.addr %s23, 4
  %s26 = scalar_lea.vmem %s0, %s25
  %v27 = vld [vmem:[%s26] sm:$0xf]
  %v28 = vld [vmem:[%s26 + $0x4] sm:$0xf]
  %v29 = vld [vmem:[%s26 + $0x8] sm:$0xf]
  %v30 = vld [vmem:[%s26 + $0xc] sm:$0xf]
  %v31 = vld [vmem:[%s26 + $0x10] sm:$0xf]
  %v32 = vld [vmem:[%s26 + $0x14] sm:$0xf]
  %v33 = vld [vmem:[%s26 + $0x18] sm:$0xf]
  %v34 = vld [vmem:[%s26 + $0x1c] sm:$0xf]
  %v35 = vld [vmem:[%s26 + $0x20] sm:$0xf]
  %v36 = vld [vmem:[%s26 + $0x24] sm:$0xf]
  %v37 = vld [vmem:[%s26 + $0x28] sm:$0xf]
  %v38 = vld [vmem:[%s26 + $0x2c] sm:$0xf]
  %v39 = vld [vmem:[%s26 + $0x30] sm:$0xf]
  %v40 = vld [vmem:[%s26 + $0x34] sm:$0xf]
  %v41 = vld [vmem:[%s26 + $0x38] sm:$0xf]
  %v42 = vld [vmem:[%s26 + $0x3c] sm:$0xf]
  %v43 = vmul.bf16 %v27, 1092632864
  %v44 = vmul.bf16 %v28, 1092632864
  %v45 = vmul.bf16 %v29, 1092632864
  %v46 = vmul.bf16 %v30, 1092632864
  %v47 = vmul.bf16 %v31, 1092632864
  %v48 = vmul.bf16 %v32, 1092632864
  %v49 = vmul.bf16 %v33, 1092632864
  %v50 = vmul.bf16 %v34, 1092632864
  %v51 = vmul.bf16 %v35, 1092632864
  %v52 = vmul.bf16 %v36, 1092632864
  %v53 = vmul.bf16 %v37, 1092632864
  %v54 = vmul.bf16 %v38, 1092632864
  %v55 = vmul.bf16 %v39, 1092632864
  %v56 = vmul.bf16 %v40, 1092632864
  %v57 = vmul.bf16 %v41, 1092632864
  %v58 = vmul.bf16 %v42, 1092632864
  %v59 = vld [vmem:[%s0] sm:$0xf]
  %v60 = vld [vmem:[%s0 + $0x4] sm:$0xf]
  %v61 = vld [vmem:[%s0 + $0x8] sm:$0xf]
  %v62 = vld [vmem:[%s0 + $0xc] sm:$0xf]
  %v63 = vld [vmem:[%s0 + $0x10] sm:$0xf]
  %v64 = vld [vmem:[%s0 + $0x14] sm:$0xf]
  %v65 = vld [vmem:[%s0 + $0x18] sm:$0xf]
  %v66 = vld [vmem:[%s0 + $0x1c] sm:$0xf]
  %v67 = vld [vmem:[%s0 + $0x20] sm:$0xf]
  %v68 = vld [vmem:[%s0 + $0x24] sm:$0xf]
  %v69 = vld [vmem:[%s0 + $0x28] sm:$0xf]
  %v70 = vld [vmem:[%s0 + $0x2c] sm:$0xf]
  %v71 = vld [vmem:[%s0 + $0x30] sm:$0xf]
  %v72 = vld [vmem:[%s0 + $0x34] sm:$0xf]
  %v73 = vld [vmem:[%s0 + $0x38] sm:$0xf]
  %v74 = vld [vmem:[%s0 + $0x3c] sm:$0xf]
  %v91 = vunpack.c.l.b16 %v43
  %v92 = vunpack.c.l.b16 %v44
  %v93 = vunpack.c.l.b16 %v45
  %v94 = vunpack.c.l.b16 %v46
  %v95 = vunpack.c.l.b16 %v47
  %v96 = vunpack.c.l.b16 %v48
  %v97 = vunpack.c.l.b16 %v49
  %v98 = vunpack.c.l.b16 %v50
  %v99 = vunpack.c.l.b16 %v51
  %v100 = vunpack.c.l.b16 %v52
  %v101 = vunpack.c.l.b16 %v53
  %v102 = vunpack.c.l.b16 %v54
  %v103 = vunpack.c.l.b16 %v55
  %v104 = vunpack.c.l.b16 %v56
  %v105 = vunpack.c.l.b16 %v57
  %v106 = vunpack.c.l.b16 %v58
  %v107 = vpack.c.b16 %v92, %v91
  %v108 = vpack.c.b16 %v94, %v93
  %v109 = vpack.c.b16 %v96, %v95
  %v110 = vpack.c.b16 %v98, %v97
  %v111 = vpack.c.b16 %v100, %v99
  %v112 = vpack.c.b16 %v102, %v101
  %v113 = vpack.c.b16 %v104, %v103
  %v114 = vpack.c.b16 %v106, %v105
  %v139 = vunpack.c.l.b16 %v59
  %v140 = vunpack.c.l.b16 %v60
  %v141 = vunpack.c.l.b16 %v61
  %v142 = vunpack.c.l.b16 %v62
  %v143 = vunpack.c.l.b16 %v63
  %v144 = vunpack.c.l.b16 %v64
  %v145 = vunpack.c.l.b16 %v65
  %v146 = vunpack.c.l.b16 %v66
  %v147 = vunpack.c.l.b16 %v67
  %v148 = vunpack.c.l.b16 %v68
  %v149 = vunpack.c.l.b16 %v69
  %v150 = vunpack.c.l.b16 %v70
  %v151 = vunpack.c.l.b16 %v71
  %v152 = vunpack.c.l.b16 %v72
  %v153 = vunpack.c.l.b16 %v73
  %v154 = vunpack.c.l.b16 %v74
  %v155 = vpack.c.b16 %v140, %v139
  %v156 = vpack.c.b16 %v142, %v141
  %v157 = vpack.c.b16 %v144, %v143
  %v158 = vpack.c.b16 %v146, %v145
  %v159 = vpack.c.b16 %v148, %v147
  %v160 = vpack.c.b16 %v150, %v149
  %v161 = vpack.c.b16 %v152, %v151
  %v162 = vpack.c.b16 %v154, %v153
  %171 = vmatprep.subr.bf16.mxu0 0
  %172 = vmatpush1.bf16.xpose.msra.mxu0 %v155
  %173 = vmatprep.subr.bf16.mxu0 0
  %174 = vmatpush1.bf16.xpose.msra.mxu0 %v156
  %175 = vmatprep.subr.bf16.mxu0 0
  %176 = vmatpush1.bf16.xpose.msra.mxu0 %v157
  %177 = vmatprep.subr.bf16.mxu0 0
  %178 = vmatpush1.bf16.xpose.msra.mxu0 %v158
  %179 = vmatprep.subr.bf16.mxu0 0
  %180 = vmatpush1.bf16.xpose.msra.mxu0 %v159
  %181 = vmatprep.subr.bf16.mxu0 0
  %182 = vmatpush1.bf16.xpose.msra.mxu0 %v160
  %183 = vmatprep.subr.bf16.mxu0 0
  %184 = vmatpush1.bf16.xpose.msra.mxu0 %v161
  %185 = vmatprep.subr.bf16.mxu0 0
  %186 = vmatpush1.bf16.xpose.msra.mxu0 %v162
  %187 = vmatprep.subr.bf16.mxu0 0
  %188 = vmatpush1.bf16.xpose.msra.mxu0 0
  %189 = vmatprep.subr.bf16.mxu0 0
  %190 = vmatpush1.bf16.xpose.msra.mxu0 0
  %191 = vmatprep.subr.bf16.mxu0 0
  %192 = vmatpush1.bf16.xpose.msra.mxu0 0
  %193 = vmatprep.subr.bf16.mxu0 0
  %194 = vmatpush1.bf16.xpose.msra.mxu0 0
  %195 = vmatprep.subr.bf16.mxu0 0
  %196 = vmatpush1.bf16.xpose.msra.mxu0 0
  %197 = vmatprep.subr.bf16.mxu0 0
  %198 = vmatpush1.bf16.xpose.msra.mxu0 0
  %199 = vmatprep.subr.bf16.mxu0 0
  %200 = vmatpush1.bf16.xpose.msra.mxu0 0
  %201 = vmatprep.subr.bf16.mxu0 0
  %202 = vmatpush1.bf16.xpose.msra.mxu0 0
  %203 = vmatprep.mubr.bf16.mxu0 0
  %204 = vmatmul.mubr.bf16.gmra.mrb[0].mxu0 %v107
  %v205 = vpop.f32.mrb[0].mxu0
  %v206 = vadd.f32 0.0, %v205
  %v207 = vpop.f32.mrb[0].mxu0
  %v208 = vpop.f32.mrb[0].mxu0
  %v209 = vadd.f32 0.0, %v208
  %v210 = vpop.f32.mrb[0].mxu0
  %211 = vmatprep.mubr.bf16.mxu0 0
  %212 = vmatmul.mubr.bf16.gmra.mrb[0].mxu0 %v108
  %v213 = vpop.f32.mrb[0].mxu0
  %v214 = vadd.f32 0.0, %v213
  %v215 = vpop.f32.mrb[0].mxu0
  %v216 = vpop.f32.mrb[0].mxu0
  %v217 = vadd.f32 0.0, %v216
  %v218 = vpop.f32.mrb[0].mxu0
  %219 = vmatprep.mubr.bf16.mxu0 0
  %220 = vmatmul.mubr.bf16.gmra.mrb[0].mxu0 %v109
  %v221 = vpop.f32.mrb[0].mxu0
  %v222 = vadd.f32 0.0, %v221
  %v223 = vpop.f32.mrb[0].mxu0
  %v224 = vpop.f32.mrb[0].mxu0
  %v225 = vadd.f32 0.0, %v224
  %v226 = vpop.f32.mrb[0].mxu0
  %227 = vmatprep.mubr.bf16.mxu0 0
  %228 = vmatmul.mubr.bf16.gmra.mrb[0].mxu0 %v110
  %v229 = vpop.f32.mrb[0].mxu0
  %v230 = vadd.f32 0.0, %v229
  %v231 = vpop.f32.mrb[0].mxu0
  %v232 = vpop.f32.mrb[0].mxu0
  %v233 = vadd.f32 0.0, %v232
  %v234 = vpop.f32.mrb[0].mxu0
  %235 = vmatprep.mubr.bf16.mxu0 0
  %236 = vmatmul.mubr.bf16.gmra.mrb[0].mxu0 %v111
  %v237 = vpop.f32.mrb[0].mxu0
  %v238 = vadd.f32 0.0, %v237
  %v239 = vpop.f32.mrb[0].mxu0
  %v240 = vpop.f32.mrb[0].mxu0
  %v241 = vadd.f32 0.0, %v240
  %v242 = vpop.f32.mrb[0].mxu0
  %243 = vmatprep.mubr.bf16.mxu0 0
  %244 = vmatmul.mubr.bf16.gmra.mrb[0].mxu0 %v112
  %v245 = vpop.f32.mrb[0].mxu0
  %v246 = vadd.f32 0.0, %v245
  %v247 = vpop.f32.mrb[0].mxu0
  %v248 = vpop.f32.mrb[0].mxu0
  %v249 = vadd.f32 0.0, %v248
  %v250 = vpop.f32.mrb[0].mxu0
  %251 = vmatprep.mubr.bf16.mxu0 0
  %252 = vmatmul.mubr.bf16.gmra.mrb[0].mxu0 %v113
  %v253 = vpop.f32.mrb[0].mxu0
  %v254 = vadd.f32 0.0, %v253
  %v255 = vpop.f32.mrb[0].mxu0
  %v256 = vpop.f32.mrb[0].mxu0
  %v257 = vadd.f32 0.0, %v256
  %v258 = vpop.f32.mrb[0].mxu0
  %259 = vmatprep.mubr.bf16.mxu0 0
  %260 = vmatmul.mubr.bf16.gmra.mrb[0].mxu0 %v114
  %v261 = vpop.f32.mrb[0].mxu0
  %v262 = vadd.f32 0.0, %v261
  %v263 = vpop.f32.mrb[0].mxu0
  %v264 = vpop.f32.mrb[0].mxu0
  %v265 = vadd.f32 0.0, %v264
  %v266 = vpop.f32.mrb[0].mxu0
  %267 = vdwg.mxu0
  %v268 = vlaneseq
  %v269 = vshrl.u32 %v268, 7
  %v270 = vadd.s32 %v269, 8
  %v271 = vadd.s32 %v269, 16
  %v272 = vadd.s32 %v269, 24
  %v273 = vadd.s32 %v269, 32
  %v274 = vadd.s32 %v269, 40
  %v275 = vadd.s32 %v269, 48
  %v276 = vadd.s32 %v269, 56
  %v277 = vadd.s32 %v269, 64
  %v278 = vadd.s32 %v269, 72
  %v279 = vadd.s32 %v269, 80
  %v280 = vadd.s32 %v269, 88
  %v281 = vadd.s32 %v269, 96
  %v282 = vadd.s32 %v269, 104
  %v283 = vadd.s32 %v269, 112
  %v284 = vadd.s32 %v269, 120
  %v285 = vstv %s22
  %v286 = vadd.s32 %v285, %v269
  %v287 = vadd.s32 %v285, %v270
  %v288 = vadd.s32 %v285, %v271
  %v289 = vadd.s32 %v285, %v272
  %v290 = vadd.s32 %v285, %v273
  %v291 = vadd.s32 %v285, %v274
  %v292 = vadd.s32 %v285, %v275
  %v293 = vadd.s32 %v285, %v276
  %v294 = vadd.s32 %v285, %v277
  %v295 = vadd.s32 %v285, %v278
  %v296 = vadd.s32 %v285, %v279
  %v297 = vadd.s32 %v285, %v280
  %v298 = vadd.s32 %v285, %v281
  %v299 = vadd.s32 %v285, %v282
  %v300 = vadd.s32 %v285, %v283
  %v301 = vadd.s32 %v285, %v284
  %v302 = vlaneseq
  %v303 = vand.u32 %v302, 127
  %vm304 = vcmp.lt.s32.totalorder %v303, 24
  %vm305 = vcmp.ne.s32.totalorder %v286, %v303
  %vm306 = vcmp.ne.s32.totalorder %v287, %v303
  %vm307 = vcmp.ne.s32.totalorder %v288, %v303
  %vm308 = vcmp.ne.s32.totalorder %v289, %v303
  %vm309 = vcmp.ne.s32.totalorder %v290, %v303
  %vm310 = vcmp.ne.s32.totalorder %v291, %v303
  %vm311 = vcmp.ne.s32.totalorder %v292, %v303
  %vm312 = vcmp.ne.s32.totalorder %v293, %v303
  %vm313 = vcmp.ne.s32.totalorder %v294, %v303
  %vm314 = vcmp.ne.s32.totalorder %v295, %v303
  %vm315 = vcmp.ne.s32.totalorder %v296, %v303
  %vm316 = vcmp.ne.s32.totalorder %v297, %v303
  %vm317 = vcmp.ne.s32.totalorder %v298, %v303
  %vm318 = vcmp.ne.s32.totalorder %v299, %v303
  %vm319 = vcmp.ne.s32.totalorder %v300, %v303
  %vm320 = vcmp.ne.s32.totalorder %v301, %v303
  %vm321 = vmand %vm305, %vm304
  %vm322 = vmand %vm306, %vm304
  %vm323 = vmand %vm307, %vm304
  %vm324 = vmand %vm308, %vm304
  %vm325 = vmand %vm309, %vm304
  %vm326 = vmand %vm310, %vm304
  %vm327 = vmand %vm311, %vm304
  %vm328 = vmand %vm312, %vm304
  %vm329 = vmand %vm313, %vm304
  %vm330 = vmand %vm314, %vm304
  %vm331 = vmand %vm315, %vm304
  %vm332 = vmand %vm316, %vm304
  %vm333 = vmand %vm317, %vm304
  %vm334 = vmand %vm318, %vm304
  %vm335 = vmand %vm319, %vm304
  %vm336 = vmand %vm320, %vm304
  %v337 = vld [vmem:[%s1] sm:$0xff]
  %v338 = vld [vmem:[%s1 + $0x8] sm:$0xff]
  %v339 = vld [vmem:[%s1 + $0x10] sm:$0xff]
  %v340 = vld [vmem:[%s1 + $0x18] sm:$0xff]
  %v341 = vld [vmem:[%s1 + $0x20] sm:$0xff]
  %v342 = vld [vmem:[%s1 + $0x28] sm:$0xff]
  %v343 = vld [vmem:[%s1 + $0x30] sm:$0xff]
  %v344 = vld [vmem:[%s1 + $0x38] sm:$0xff]
  %v345 = vld [vmem:[%s1 + $0x40] sm:$0xff]
  %v346 = vld [vmem:[%s1 + $0x48] sm:$0xff]
  %v347 = vld [vmem:[%s1 + $0x50] sm:$0xff]
  %v348 = vld [vmem:[%s1 + $0x58] sm:$0xff]
  %v349 = vld [vmem:[%s1 + $0x60] sm:$0xff]
  %v350 = vld [vmem:[%s1 + $0x68] sm:$0xff]
  %v351 = vld [vmem:[%s1 + $0x70] sm:$0xff]
  %v352 = vld [vmem:[%s1 + $0x78] sm:$0xff]
  %v353 = vld [vmem:[%s2] sm:$0x1]
  %354 = vset.pattern.permute.xlu0 0
  %355 = vperm.xlu0 %354, %v337
  %v356 = vpop.permute.xlu0 %355
  %357 = vset.pattern.permute.xlu0 0
  %358 = vperm.xlu0 %357, %v338
  %v359 = vpop.permute.xlu0 %358
  %360 = vset.pattern.permute.xlu0 0
  %361 = vperm.xlu0 %360, %v339
  %v362 = vpop.permute.xlu0 %361
  %363 = vset.pattern.permute.xlu0 0
  %364 = vperm.xlu0 %363, %v340
  %v365 = vpop.permute.xlu0 %364
  %366 = vset.pattern.permute.xlu0 0
  %367 = vperm.xlu0 %366, %v341
  %v368 = vpop.permute.xlu0 %367
  %369 = vset.pattern.permute.xlu0 0
  %370 = vperm.xlu0 %369, %v342
  %v371 = vpop.permute.xlu0 %370
  %372 = vset.pattern.permute.xlu0 0
  %373 = vperm.xlu0 %372, %v343
  %v374 = vpop.permute.xlu0 %373
  %375 = vset.pattern.permute.xlu0 0
  %376 = vperm.xlu0 %375, %v344
  %v377 = vpop.permute.xlu0 %376
  %378 = vset.pattern.permute.xlu0 0
  %379 = vperm.xlu0 %378, %v345
  %v380 = vpop.permute.xlu0 %379
  %381 = vset.pattern.permute.xlu0 0
  %382 = vperm.xlu0 %381, %v346
  %v383 = vpop.permute.xlu0 %382
  %384 = vset.pattern.permute.xlu0 0
  %385 = vperm.xlu0 %384, %v347
  %v386 = vpop.permute.xlu0 %385
  %387 = vset.pattern.permute.xlu0 0
  %388 = vperm.xlu0 %387, %v348
  %v389 = vpop.permute.xlu0 %388
  %390 = vset.pattern.permute.xlu0 0
  %391 = vperm.xlu0 %390, %v349
  %v392 = vpop.permute.xlu0 %391
  %393 = vset.pattern.permute.xlu0 0
  %394 = vperm.xlu0 %393, %v350
  %v395 = vpop.permute.xlu0 %394
  %396 = vset.pattern.permute.xlu0 0
  %397 = vperm.xlu0 %396, %v351
  %v398 = vpop.permute.xlu0 %397
  %399 = vset.pattern.permute.xlu0 0
  %400 = vperm.xlu0 %399, %v352
  %v401 = vpop.permute.xlu0 %400
  %v402 = vlaneseq
  %v403 = vshrl.u32 %v402, 7
  %v404 = vsub.s32 0, %v403
  %v405 = vrot.slane %v353, %v404
  %vm406 = vcmp.eq.s32.totalorder %v356, %v405
  %vm407 = vcmp.eq.s32.totalorder %v359, %v405
  %vm408 = vcmp.eq.s32.totalorder %v362, %v405
  %vm409 = vcmp.eq.s32.totalorder %v365, %v405
  %vm410 = vcmp.eq.s32.totalorder %v368, %v405
  %vm411 = vcmp.eq.s32.totalorder %v371, %v405
  %vm412 = vcmp.eq.s32.totalorder %v374, %v405
  %vm413 = vcmp.eq.s32.totalorder %v377, %v405
  %vm414 = vcmp.eq.s32.totalorder %v380, %v405
  %vm415 = vcmp.eq.s32.totalorder %v383, %v405
  %vm416 = vcmp.eq.s32.totalorder %v386, %v405
  %vm417 = vcmp.eq.s32.totalorder %v389, %v405
  %vm418 = vcmp.eq.s32.totalorder %v392, %v405
  %vm419 = vcmp.eq.s32.totalorder %v395, %v405
  %vm420 = vcmp.eq.s32.totalorder %v398, %v405
  %vm421 = vcmp.eq.s32.totalorder %v401, %v405
  %vm422 = vmand %vm406, %vm321
  %vm423 = vmand %vm407, %vm322
  %vm424 = vmand %vm408, %vm323
  %vm425 = vmand %vm409, %vm324
  %vm426 = vmand %vm410, %vm325
  %vm427 = vmand %vm411, %vm326
  %vm428 = vmand %vm412, %vm327
  %vm429 = vmand %vm413, %vm328
  %vm430 = vmand %vm414, %vm329
  %vm431 = vmand %vm415, %vm330
  %vm432 = vmand %vm416, %vm331
  %vm433 = vmand %vm417, %vm332
  %vm434 = vmand %vm418, %vm333
  %vm435 = vmand %vm419, %vm334
  %vm436 = vmand %vm420, %vm335
  %vm437 = vmand %vm421, %vm336
  %v438 = vsel %vm422, 1.0, 0.0
  %v439 = vsel %vm423, 1.0, 0.0
  %v440 = vsel %vm424, 1.0, 0.0
  %v441 = vsel %vm425, 1.0, 0.0
  %v442 = vsel %vm426, 1.0, 0.0
  %v443 = vsel %vm427, 1.0, 0.0
  %v444 = vsel %vm428, 1.0, 0.0
  %v445 = vsel %vm429, 1.0, 0.0
  %v446 = vsel %vm430, 1.0, 0.0
  %v447 = vsel %vm431, 1.0, 0.0
  %v448 = vsel %vm432, 1.0, 0.0
  %v449 = vsel %vm433, 1.0, 0.0
  %v450 = vsel %vm434, 1.0, 0.0
  %v451 = vsel %vm435, 1.0, 0.0
  %v452 = vsel %vm436, 1.0, 0.0
  %v453 = vsel %vm437, 1.0, 0.0
  %v454 = vsel %vm304, %v206, -1e+30
  %v455 = vsel %vm304, %v209, -1e+30
  %v456 = vsel %vm304, %v214, -1e+30
  %v457 = vsel %vm304, %v217, -1e+30
  %v458 = vsel %vm304, %v222, -1e+30
  %v459 = vsel %vm304, %v225, -1e+30
  %v460 = vsel %vm304, %v230, -1e+30
  %v461 = vsel %vm304, %v233, -1e+30
  %v462 = vsel %vm304, %v238, -1e+30
  %v463 = vsel %vm304, %v241, -1e+30
  %v464 = vsel %vm304, %v246, -1e+30
  %v465 = vsel %vm304, %v249, -1e+30
  %v466 = vsel %vm304, %v254, -1e+30
  %v467 = vsel %vm304, %v257, -1e+30
  %v468 = vsel %vm304, %v262, -1e+30
  %v469 = vsel %vm304, %v265, -1e+30
  %470 = vmax.xlane.f32.xlu0 %v454
  %v471 = vpop.xlane.xlu0 %470
  %472 = vmax.xlane.f32.xlu0 %v455
  %v473 = vpop.xlane.xlu0 %472
  %474 = vmax.xlane.f32.xlu0 %v456
  %v475 = vpop.xlane.xlu0 %474
  %476 = vmax.xlane.f32.xlu0 %v457
  %v477 = vpop.xlane.xlu0 %476
  %478 = vmax.xlane.f32.xlu0 %v458
  %v479 = vpop.xlane.xlu0 %478
  %480 = vmax.xlane.f32.xlu0 %v459
  %v481 = vpop.xlane.xlu0 %480
  %482 = vmax.xlane.f32.xlu0 %v460
  %v483 = vpop.xlane.xlu0 %482
  %484 = vmax.xlane.f32.xlu0 %v461
  %v485 = vpop.xlane.xlu0 %484
  %486 = vmax.xlane.f32.xlu0 %v462
  %v487 = vpop.xlane.xlu0 %486
  %488 = vmax.xlane.f32.xlu0 %v463
  %v489 = vpop.xlane.xlu0 %488
  %490 = vmax.xlane.f32.xlu0 %v464
  %v491 = vpop.xlane.xlu0 %490
  %492 = vmax.xlane.f32.xlu0 %v465
  %v493 = vpop.xlane.xlu0 %492
  %494 = vmax.xlane.f32.xlu0 %v466
  %v495 = vpop.xlane.xlu0 %494
  %496 = vmax.xlane.f32.xlu0 %v467
  %v497 = vpop.xlane.xlu0 %496
  %498 = vmax.xlane.f32.xlu0 %v468
  %v499 = vpop.xlane.xlu0 %498
  %500 = vmax.xlane.f32.xlu0 %v469
  %v501 = vpop.xlane.xlu0 %500
  %v502 = vsub.f32 %v206, %v471
  %v503 = vsub.f32 %v209, %v473
  %v504 = vsub.f32 %v214, %v475
  %v505 = vsub.f32 %v217, %v477
  %v506 = vsub.f32 %v222, %v479
  %v507 = vsub.f32 %v225, %v481
  %v508 = vsub.f32 %v230, %v483
  %v509 = vsub.f32 %v233, %v485
  %v510 = vsub.f32 %v238, %v487
  %v511 = vsub.f32 %v241, %v489
  %v512 = vsub.f32 %v246, %v491
  %v513 = vsub.f32 %v249, %v493
  %v514 = vsub.f32 %v254, %v495
  %v515 = vsub.f32 %v257, %v497
  %v516 = vsub.f32 %v262, %v499
  %v517 = vsub.f32 %v265, %v501
  %v518 = vmul.f32 %v502, 1.442695
  %v519 = vpow.pop %v518
  %v520 = vmul.f32 %v503, 1.442695
  %v521 = vpow.pop %v520
  %v522 = vmul.f32 %v504, 1.442695
  %v523 = vpow.pop %v522
  %v524 = vmul.f32 %v505, 1.442695
  %v525 = vpow.pop %v524
  %v526 = vmul.f32 %v506, 1.442695
  %v527 = vpow.pop %v526
  %v528 = vmul.f32 %v507, 1.442695
  %v529 = vpow.pop %v528
  %v530 = vmul.f32 %v508, 1.442695
  %v531 = vpow.pop %v530
  %v532 = vmul.f32 %v509, 1.442695
  %v533 = vpow.pop %v532
  %v534 = vmul.f32 %v510, 1.442695
  %v535 = vpow.pop %v534
  %v536 = vmul.f32 %v511, 1.442695
  %v537 = vpow.pop %v536
  %v538 = vmul.f32 %v512, 1.442695
  %v539 = vpow.pop %v538
  %v540 = vmul.f32 %v513, 1.442695
  %v541 = vpow.pop %v540
  %v542 = vmul.f32 %v514, 1.442695
  %v543 = vpow.pop %v542
  %v544 = vmul.f32 %v515, 1.442695
  %v545 = vpow.pop %v544
  %v546 = vmul.f32 %v516, 1.442695
  %v547 = vpow.pop %v546
  %v548 = vmul.f32 %v517, 1.442695
  %v549 = vpow.pop %v548
  %v550 = vsel %vm321, %v519, 0.0
  %v551 = vsel %vm322, %v521, 0.0
  %v552 = vsel %vm323, %v523, 0.0
  %v553 = vsel %vm324, %v525, 0.0
  %v554 = vsel %vm325, %v527, 0.0
  %v555 = vsel %vm326, %v529, 0.0
  %v556 = vsel %vm327, %v531, 0.0
  %v557 = vsel %vm328, %v533, 0.0
  %v558 = vsel %vm329, %v535, 0.0
  %v559 = vsel %vm330, %v537, 0.0
  %v560 = vsel %vm331, %v539, 0.0
  %v561 = vsel %vm332, %v541, 0.0
  %v562 = vsel %vm333, %v543, 0.0
  %v563 = vsel %vm334, %v545, 0.0
  %v564 = vsel %vm335, %v547, 0.0
  %v565 = vsel %vm336, %v549, 0.0
  %v566 = vld [vmem:[%s3] sm:$0x1]
  %v567 = vld [vmem:[%s4] sm:$0x1]
  %v569 = vlaneseq
  %v570 = vshrl.u32 %v569, 7
  %v571 = vsub.s32 0, %v570
  %v572 = vrot.slane %v567, %v571
  %v574 = vmul.f32 %v438, %v572
  %v575 = vmul.f32 %v439, %v572
  %v576 = vmul.f32 %v440, %v572
  %v577 = vmul.f32 %v441, %v572
  %v578 = vmul.f32 %v442, %v572
  %v579 = vmul.f32 %v443, %v572
  %v580 = vmul.f32 %v444, %v572
  %v581 = vmul.f32 %v445, %v572
  %v582 = vmul.f32 %v446, %v572
  %v583 = vmul.f32 %v447, %v572
  %v584 = vmul.f32 %v448, %v572
  %v585 = vmul.f32 %v449, %v572
  %v586 = vmul.f32 %v450, %v572
  %v587 = vmul.f32 %v451, %v572
  %v588 = vmul.f32 %v452, %v572
  %v589 = vmul.f32 %v453, %v572
  %v591 = vlaneseq
  %v592 = vshrl.u32 %v591, 7
  %v593 = vsub.s32 0, %v592
  %v594 = vrot.slane %v566, %v593
  %v596 = vadd.f32 %v594, %v574
  %v597 = vadd.f32 %v594, %v575
  %v598 = vadd.f32 %v594, %v576
  %v599 = vadd.f32 %v594, %v577
  %v600 = vadd.f32 %v594, %v578
  %v601 = vadd.f32 %v594, %v579
  %v602 = vadd.f32 %v594, %v580
  %v603 = vadd.f32 %v594, %v581
  %v604 = vadd.f32 %v594, %v582
  %v605 = vadd.f32 %v594, %v583
  %v606 = vadd.f32 %v594, %v584
  %v607 = vadd.f32 %v594, %v585
  %v608 = vadd.f32 %v594, %v586
  %v609 = vadd.f32 %v594, %v587
  %v610 = vadd.f32 %v594, %v588
  %v611 = vadd.f32 %v594, %v589
  %v612 = vmul.f32 %v550, %v596
  %v613 = vmul.f32 %v551, %v597
  %v614 = vmul.f32 %v552, %v598
  %v615 = vmul.f32 %v553, %v599
  %v616 = vmul.f32 %v554, %v600
  %v617 = vmul.f32 %v555, %v601
  %v618 = vmul.f32 %v556, %v602
  %v619 = vmul.f32 %v557, %v603
  %v620 = vmul.f32 %v558, %v604
  %v621 = vmul.f32 %v559, %v605
  %v622 = vmul.f32 %v560, %v606
  %v623 = vmul.f32 %v561, %v607
  %v624 = vmul.f32 %v562, %v608
  %v625 = vmul.f32 %v563, %v609
  %v626 = vmul.f32 %v564, %v610
  %v627 = vmul.f32 %v565, %v611
  %628 = vadd.xlane.f32.xlu0 %v612
  %v629 = vpop.xlane.xlu0 %628
  %630 = vadd.xlane.f32.xlu0 %v613
  %v631 = vpop.xlane.xlu0 %630
  %632 = vadd.xlane.f32.xlu0 %v614
  %v633 = vpop.xlane.xlu0 %632
  %634 = vadd.xlane.f32.xlu0 %v615
  %v635 = vpop.xlane.xlu0 %634
  %636 = vadd.xlane.f32.xlu0 %v616
  %v637 = vpop.xlane.xlu0 %636
  %638 = vadd.xlane.f32.xlu0 %v617
  %v639 = vpop.xlane.xlu0 %638
  %640 = vadd.xlane.f32.xlu0 %v618
  %v641 = vpop.xlane.xlu0 %640
  %642 = vadd.xlane.f32.xlu0 %v619
  %v643 = vpop.xlane.xlu0 %642
  %644 = vadd.xlane.f32.xlu0 %v620
  %v645 = vpop.xlane.xlu0 %644
  %646 = vadd.xlane.f32.xlu0 %v621
  %v647 = vpop.xlane.xlu0 %646
  %648 = vadd.xlane.f32.xlu0 %v622
  %v649 = vpop.xlane.xlu0 %648
  %650 = vadd.xlane.f32.xlu0 %v623
  %v651 = vpop.xlane.xlu0 %650
  %652 = vadd.xlane.f32.xlu0 %v624
  %v653 = vpop.xlane.xlu0 %652
  %654 = vadd.xlane.f32.xlu0 %v625
  %v655 = vpop.xlane.xlu0 %654
  %656 = vadd.xlane.f32.xlu0 %v626
  %v657 = vpop.xlane.xlu0 %656
  %658 = vadd.xlane.f32.xlu0 %v627
  %v659 = vpop.xlane.xlu0 %658
  %v660 = vlog2.pop %v629
  %v661 = vmul.f32 %v660, 0.6931472
  %v662 = vlog2.pop %v631
  %v663 = vmul.f32 %v662, 0.6931472
  %v664 = vlog2.pop %v633
  %v665 = vmul.f32 %v664, 0.6931472
  %v666 = vlog2.pop %v635
  %v667 = vmul.f32 %v666, 0.6931472
  %v668 = vlog2.pop %v637
  %v669 = vmul.f32 %v668, 0.6931472
  %v670 = vlog2.pop %v639
  %v671 = vmul.f32 %v670, 0.6931472
  %v672 = vlog2.pop %v641
  %v673 = vmul.f32 %v672, 0.6931472
  %v674 = vlog2.pop %v643
  %v675 = vmul.f32 %v674, 0.6931472
  %v676 = vlog2.pop %v645
  %v677 = vmul.f32 %v676, 0.6931472
  %v678 = vlog2.pop %v647
  %v679 = vmul.f32 %v678, 0.6931472
  %v680 = vlog2.pop %v649
  %v681 = vmul.f32 %v680, 0.6931472
  %v682 = vlog2.pop %v651
  %v683 = vmul.f32 %v682, 0.6931472
  %v684 = vlog2.pop %v653
  %v685 = vmul.f32 %v684, 0.6931472
  %v686 = vlog2.pop %v655
  %v687 = vmul.f32 %v686, 0.6931472
  %v688 = vlog2.pop %v657
  %v689 = vmul.f32 %v688, 0.6931472
  %v690 = vlog2.pop %v659
  %v691 = vmul.f32 %v690, 0.6931472
  %v692 = vmul.f32 %v438, %v502
  %v693 = vmul.f32 %v439, %v503
  %v694 = vmul.f32 %v440, %v504
  %v695 = vmul.f32 %v441, %v505
  %v696 = vmul.f32 %v442, %v506
  %v697 = vmul.f32 %v443, %v507
  %v698 = vmul.f32 %v444, %v508
  %v699 = vmul.f32 %v445, %v509
  %v700 = vmul.f32 %v446, %v510
  %v701 = vmul.f32 %v447, %v511
  %v702 = vmul.f32 %v448, %v512
  %v703 = vmul.f32 %v449, %v513
  %v704 = vmul.f32 %v450, %v514
  %v705 = vmul.f32 %v451, %v515
  %v706 = vmul.f32 %v452, %v516
  %v707 = vmul.f32 %v453, %v517
  %708 = vadd.xlane.f32.xlu0 %v692
  %v709 = vpop.xlane.xlu0 %708
  %710 = vadd.xlane.f32.xlu0 %v693
  %v711 = vpop.xlane.xlu0 %710
  %712 = vadd.xlane.f32.xlu0 %v694
  %v713 = vpop.xlane.xlu0 %712
  %714 = vadd.xlane.f32.xlu0 %v695
  %v715 = vpop.xlane.xlu0 %714
  %716 = vadd.xlane.f32.xlu0 %v696
  %v717 = vpop.xlane.xlu0 %716
  %718 = vadd.xlane.f32.xlu0 %v697
  %v719 = vpop.xlane.xlu0 %718
  %720 = vadd.xlane.f32.xlu0 %v698
  %v721 = vpop.xlane.xlu0 %720
  %722 = vadd.xlane.f32.xlu0 %v699
  %v723 = vpop.xlane.xlu0 %722
  %724 = vadd.xlane.f32.xlu0 %v700
  %v725 = vpop.xlane.xlu0 %724
  %726 = vadd.xlane.f32.xlu0 %v701
  %v727 = vpop.xlane.xlu0 %726
  %728 = vadd.xlane.f32.xlu0 %v702
  %v729 = vpop.xlane.xlu0 %728
  %730 = vadd.xlane.f32.xlu0 %v703
  %v731 = vpop.xlane.xlu0 %730
  %732 = vadd.xlane.f32.xlu0 %v704
  %v733 = vpop.xlane.xlu0 %732
  %734 = vadd.xlane.f32.xlu0 %v705
  %v735 = vpop.xlane.xlu0 %734
  %736 = vadd.xlane.f32.xlu0 %v706
  %v737 = vpop.xlane.xlu0 %736
  %738 = vadd.xlane.f32.xlu0 %v707
  %v739 = vpop.xlane.xlu0 %738
  %740 = vadd.xlane.f32.xlu0 %v438
  %v741 = vpop.xlane.xlu0 %740
  %742 = vadd.xlane.f32.xlu0 %v439
  %v743 = vpop.xlane.xlu0 %742
  %744 = vadd.xlane.f32.xlu0 %v440
  %v745 = vpop.xlane.xlu0 %744
  %746 = vadd.xlane.f32.xlu0 %v441
  %v747 = vpop.xlane.xlu0 %746
  %748 = vadd.xlane.f32.xlu0 %v442
  %v749 = vpop.xlane.xlu0 %748
  %750 = vadd.xlane.f32.xlu0 %v443
  %v751 = vpop.xlane.xlu0 %750
  %752 = vadd.xlane.f32.xlu0 %v444
  %v753 = vpop.xlane.xlu0 %752
  %754 = vadd.xlane.f32.xlu0 %v445
  %v755 = vpop.xlane.xlu0 %754
  %756 = vadd.xlane.f32.xlu0 %v446
  %v757 = vpop.xlane.xlu0 %756
  %758 = vadd.xlane.f32.xlu0 %v447
  %v759 = vpop.xlane.xlu0 %758
  %760 = vadd.xlane.f32.xlu0 %v448
  %v761 = vpop.xlane.xlu0 %760
  %762 = vadd.xlane.f32.xlu0 %v449
  %v763 = vpop.xlane.xlu0 %762
  %764 = vadd.xlane.f32.xlu0 %v450
  %v765 = vpop.xlane.xlu0 %764
  %766 = vadd.xlane.f32.xlu0 %v451
  %v767 = vpop.xlane.xlu0 %766
  %768 = vadd.xlane.f32.xlu0 %v452
  %v769 = vpop.xlane.xlu0 %768
  %770 = vadd.xlane.f32.xlu0 %v453
  %v771 = vpop.xlane.xlu0 %770
  %v772 = vmul.f32 %v661, %v741
  %v773 = vmul.f32 %v663, %v743
  %v774 = vmul.f32 %v665, %v745
  %v775 = vmul.f32 %v667, %v747
  %v776 = vmul.f32 %v669, %v749
  %v777 = vmul.f32 %v671, %v751
  %v778 = vmul.f32 %v673, %v753
  %v779 = vmul.f32 %v675, %v755
  %v780 = vmul.f32 %v677, %v757
  %v781 = vmul.f32 %v679, %v759
  %v782 = vmul.f32 %v681, %v761
  %v783 = vmul.f32 %v683, %v763
  %v784 = vmul.f32 %v685, %v765
  %v785 = vmul.f32 %v687, %v767
  %v786 = vmul.f32 %v689, %v769
  %v787 = vmul.f32 %v691, %v771
  %v788 = vsub.f32 %v709, %v772
  %v789 = vsub.f32 %v711, %v773
  %v790 = vsub.f32 %v713, %v774
  %v791 = vsub.f32 %v715, %v775
  %v792 = vsub.f32 %v717, %v776
  %v793 = vsub.f32 %v719, %v777
  %v794 = vsub.f32 %v721, %v778
  %v795 = vsub.f32 %v723, %v779
  %v796 = vsub.f32 %v725, %v780
  %v797 = vsub.f32 %v727, %v781
  %v798 = vsub.f32 %v729, %v782
  %v799 = vsub.f32 %v731, %v783
  %v800 = vsub.f32 %v733, %v784
  %v801 = vsub.f32 %v735, %v785
  %v802 = vsub.f32 %v737, %v786
  %v803 = vsub.f32 %v739, %v787
  %v804 = vmax.f32 %v741, 1.0
  %v805 = vmax.f32 %v743, 1.0
  %v806 = vmax.f32 %v745, 1.0
  %v807 = vmax.f32 %v747, 1.0
  %v808 = vmax.f32 %v749, 1.0
  %v809 = vmax.f32 %v751, 1.0
  %v810 = vmax.f32 %v753, 1.0
  %v811 = vmax.f32 %v755, 1.0
  %v812 = vmax.f32 %v757, 1.0
  %v813 = vmax.f32 %v759, 1.0
  %v814 = vmax.f32 %v761, 1.0
  %v815 = vmax.f32 %v763, 1.0
  %v816 = vmax.f32 %v765, 1.0
  %v817 = vmax.f32 %v767, 1.0
  %v818 = vmax.f32 %v769, 1.0
  %v819 = vmax.f32 %v771, 1.0
  %v820 = vrcp.pop %v804
  %v821 = vmul.f32 %v788, %v820
  %v822 = vrcp.pop %v805
  %v823 = vmul.f32 %v789, %v822
  %v824 = vrcp.pop %v806
  %v825 = vmul.f32 %v790, %v824
  %v826 = vrcp.pop %v807
  %v827 = vmul.f32 %v791, %v826
  %v828 = vrcp.pop %v808
  %v829 = vmul.f32 %v792, %v828
  %v830 = vrcp.pop %v809
  %v831 = vmul.f32 %v793, %v830
  %v832 = vrcp.pop %v810
  %v833 = vmul.f32 %v794, %v832
  %v834 = vrcp.pop %v811
  %v835 = vmul.f32 %v795, %v834
  %v836 = vrcp.pop %v812
  %v837 = vmul.f32 %v796, %v836
  %v838 = vrcp.pop %v813
  %v839 = vmul.f32 %v797, %v838
  %v840 = vrcp.pop %v814
  %v841 = vmul.f32 %v798, %v840
  %v842 = vrcp.pop %v815
  %v843 = vmul.f32 %v799, %v842
  %v844 = vrcp.pop %v816
  %v845 = vmul.f32 %v800, %v844
  %v846 = vrcp.pop %v817
  %v847 = vmul.f32 %v801, %v846
  %v848 = vrcp.pop %v818
  %v849 = vmul.f32 %v802, %v848
  %v850 = vrcp.pop %v819
  %v851 = vmul.f32 %v803, %v850
  %vm852 = vcmp.lt.s32.totalorder %v286, 24
  %vm853 = vcmp.lt.s32.totalorder %v287, 24
  %vm854 = vcmp.lt.s32.totalorder %v288, 24
  %vm855 = vcmp.lt.s32.totalorder %v289, 24
  %vm856 = vcmp.lt.s32.totalorder %v290, 24
  %vm857 = vcmp.lt.s32.totalorder %v291, 24
  %vm858 = vcmp.lt.s32.totalorder %v292, 24
  %vm859 = vcmp.lt.s32.totalorder %v293, 24
  %vm860 = vcmp.lt.s32.totalorder %v294, 24
  %vm861 = vcmp.lt.s32.totalorder %v295, 24
  %vm862 = vcmp.lt.s32.totalorder %v296, 24
  %vm863 = vcmp.lt.s32.totalorder %v297, 24
  %vm864 = vcmp.lt.s32.totalorder %v298, 24
  %vm865 = vcmp.lt.s32.totalorder %v299, 24
  %vm866 = vcmp.lt.s32.totalorder %v300, 24
  %vm867 = vcmp.lt.s32.totalorder %v301, 24
  %v868 = vsel %vm852, %v821, 0.0
  %v869 = vsel %vm853, %v823, 0.0
  %v870 = vsel %vm854, %v825, 0.0
  %v871 = vsel %vm855, %v827, 0.0
  %v872 = vsel %vm856, %v829, 0.0
  %v873 = vsel %vm857, %v831, 0.0
  %v874 = vsel %vm858, %v833, 0.0
  %v875 = vsel %vm859, %v835, 0.0
  %v876 = vsel %vm860, %v837, 0.0
  %v877 = vsel %vm861, %v839, 0.0
  %v878 = vsel %vm862, %v841, 0.0
  %v879 = vsel %vm863, %v843, 0.0
  %v880 = vsel %vm864, %v845, 0.0
  %v881 = vsel %vm865, %v847, 0.0
  %v882 = vsel %vm866, %v849, 0.0
  %v883 = vsel %vm867, %v851, 0.0
  %vm884 = vcmask 7168
  %885 = vst.msk [vmem:[%s5] sm:$0xff] %vm884, %v868
  %886 = vst.msk [vmem:[%s5 + $0x8] sm:$0xff] %vm884, %v869
  %887 = vst.msk [vmem:[%s5 + $0x10] sm:$0xff] %vm884, %v870
  %888 = vst.msk [vmem:[%s5 + $0x18] sm:$0xff] %vm884, %v871
  %889 = vst.msk [vmem:[%s5 + $0x20] sm:$0xff] %vm884, %v872
  %890 = vst.msk [vmem:[%s5 + $0x28] sm:$0xff] %vm884, %v873
  %891 = vst.msk [vmem:[%s5 + $0x30] sm:$0xff] %vm884, %v874
  %892 = vst.msk [vmem:[%s5 + $0x38] sm:$0xff] %vm884, %v875
  %893 = vst.msk [vmem:[%s5 + $0x40] sm:$0xff] %vm884, %v876
  %894 = vst.msk [vmem:[%s5 + $0x48] sm:$0xff] %vm884, %v877
  %895 = vst.msk [vmem:[%s5 + $0x50] sm:$0xff] %vm884, %v878
  %896 = vst.msk [vmem:[%s5 + $0x58] sm:$0xff] %vm884, %v879
  %897 = vst.msk [vmem:[%s5 + $0x60] sm:$0xff] %vm884, %v880
  %898 = vst.msk [vmem:[%s5 + $0x68] sm:$0xff] %vm884, %v881
  %899 = vst.msk [vmem:[%s5 + $0x70] sm:$0xff] %vm884, %v882
  %900 = vst.msk [vmem:[%s5 + $0x78] sm:$0xff] %vm884, %v883
  // Predicated region
  $region22: #{tpu_custom_call.1} parent=0 // pred_check
    _
  $region23: #{tpu_custom_call.1} parent=0 // pred_check_branch
    %902 = sbr.rel (0) target = $region25
  $region24: #{tpu_custom_call.1} parent=0 // pred_region
    _
  $region25: #{tpu_custom_call.1} parent=0 // pred_fallthru
    _
  // Predicated region
  $region26: #{tpu_custom_call.1} parent=0 // pred_check
    _
  $region27: #{tpu_custom_call.1} parent=0 // pred_check_branch
    %904 = sbr.rel (0) target = $region29
  $region28: #{tpu_custom_call.1} parent=0 // pred_region
    _
  $region29: #{tpu_custom_call.1} parent=0 // pred_fallthru
    _

</llo_original>
